<compile_context>
chip_gen: v7x
topology: tpu7x:2x2x1
jax: 0.10.0
libtpu: 0.0.40
codegen_flags: <defaults>
</compile_context>

<pallas_src>
import math
from functools import partial

import jax
import jax.numpy as jnp
from jax.experimental import pallas as pl
from jax.experimental.pallas import tpu as pltpu

SELU_ALPHA = 1.6732632423543772
SELU_SCALE = 1.0507009873554805

LANE = 128
MIN_TILE = 128
FUSE_FIN_MAX = 512      # fuse the support matmul into aggregation if f_in <= this


def _round_up(x, m):
    return ((x + m - 1) // m) * m


def _pad2(a, rows, cols, dtype):
    r, c = a.shape
    return jnp.pad(a, ((0, rows - r), (0, cols - c))).astype(dtype)


def _selu(x):
    return SELU_SCALE * jnp.where(
        x > 0, x, SELU_ALPHA * (jnp.exp(jnp.minimum(x, 0.0)) - 1.0))


def _vmem_limit_bytes():
    """Generation-aware scoped-VMEM limit (per TensorCore)."""
    cap = None
    try:
        cap = int(pltpu.get_tpu_info().vmem_capacity_bytes)
    except Exception:
        cap = None
    if not cap or cap <= 0:
        cap = 64 * 1024 * 1024                      # conservative fallback
    # ~48 MiB on v7x (64 MiB/TC), ~96 MiB on v5e/v6e (128 MiB).
    return max(32 * 1024 * 1024, min(int(cap * 0.75), 96 * 1024 * 1024))


def _pick_tiles(n_pad):
    # Row axis is the only "parallel" axis -> keep >= 2 tiles so v7x's second
    # TensorCore has work.
    tm = MIN_TILE
    for cand in (512, 256):
        if n_pad % cand == 0 and n_pad // cand >= 2:
            tm = cand
            break
    # Reduction (adj-column) axis is serial -> make the streamed adj tile as
    # wide as divisibility allows to amortize the ~0.35us/grid-step overhead.
    tk = MIN_TILE
    for cand in (2048, 1024, 512, 256):
        if n_pad % cand == 0:
            tk = cand
            break
    return tm, tk


def prepare_adjacency(adj):
    """Pad to a multiple of 256 (>= 2 row tiles) and cast to bf16.

    Do this ONCE and reuse across forward passes: the pad + convert touches
    O(N^2) HBM and would otherwise add roughly one extra layer's worth of adj
    traffic per call.
    """
    n = adj.shape[0]
    n_pad = _round_up(max(n, 2 * MIN_TILE), 2 * MIN_TILE)
    return _pad2(adj, n_pad, n_pad, jnp.bfloat16)


# ---------------------------------------------------------------------------
# small-graph fast path: whole network in one pallas_call (adj resident)
# ---------------------------------------------------------------------------
def _small_fused_kernel(adj_ref, x_ref, *refs):
    *param_refs, wc_ref, bc_ref, out_ref = refs
    adj = adj_ref[...]
    h = x_ref[...]
    for idx in range(0, len(param_refs), 2):
        w_ref, b_ref = param_refs[idx], param_refs[idx + 1]
        sup = jnp.dot(h, w_ref[...], preferred_element_type=jnp.float32)
        agg = jnp.dot(adj, sup.astype(jnp.bfloat16),
                      preferred_element_type=jnp.float32)
        h = (_selu(agg) + b_ref[...]).astype(jnp.bfloat16)
    out_ref[...] = (jnp.dot(h, wc_ref[...], preferred_element_type=jnp.float32)
                    + bc_ref[...])


def _forward_small(adj_p, h, gc_padded, wc_p, bc_p, vmem_limit):
    n_pad = adj_p.shape[0]
    c_pad = wc_p.shape[1]
    inputs = [adj_p, h]
    for w, b in gc_padded:
        inputs += [w, b]
    inputs += [wc_p, bc_p]
    return pl.pallas_call(
        _small_fused_kernel,
        out_shape=jax.ShapeDtypeStruct((n_pad, c_pad), jnp.float32),
        compiler_params=pltpu.CompilerParams(vmem_limit_bytes=vmem_limit),
    )(*inputs)


def _fits_small_path(n_pad, f_in_pad, h_pad, c_pad, vmem_limit):
    operand = (n_pad * n_pad * 2                       # adj bf16
               + n_pad * f_in_pad * 2                  # x bf16
               + (f_in_pad + 2 * h_pad) * h_pad * 2    # GC weights bf16
               + h_pad * c_pad * 2 + c_pad * 4         # classifier weights/bias
               + n_pad * c_pad * 4)                    # f32 logits out
    temps = 6 * n_pad * max(h_pad, c_pad) * 4          # f32 intermediates bound
    budget = min(24 * 1024 * 1024, vmem_limit // 2)
    return 2 * operand + temps <= budget


# ---------------------------------------------------------------------------
# tiled path, fused layer:  out = SELU(adj @ (h @ W)) + b  [+ fused classifier]
#   grid = (row_tiles [parallel], adj-col tiles [arbitrary, reduction last])
# ---------------------------------------------------------------------------
def _fused_layer_kernel(adj_ref, h_ref, w_ref, b_ref, out_ref, acc_ref):
    k = pl.program_id(1)

    @pl.when(k == 0)
    def _():
        acc_ref[...] = jnp.zeros_like(acc_ref)

    sup = jnp.dot(h_ref[...], w_ref[...], preferred_element_type=jnp.float32)
    acc_ref[...] += jnp.dot(adj_ref[...], sup.astype(jnp.bfloat16),
                            preferred_element_type=jnp.float32)

    @pl.when(k == pl.num_programs(1) - 1)
    def _():
        out_ref[...] = (_selu(acc_ref[...]) + b_ref[...]).astype(out_ref.dtype)


def _fused_layer_clf_kernel(adj_ref, h_ref, w_ref, b_ref, wc_ref, bc_ref,
                            out_ref, acc_ref):
    k = pl.program_id(1)

    @pl.when(k == 0)
    def _():
        acc_ref[...] = jnp.zeros_like(acc_ref)

    sup = jnp.dot(h_ref[...], w_ref[...], preferred_element_type=jnp.float32)
    acc_ref[...] += jnp.dot(adj_ref[...], sup.astype(jnp.bfloat16),
                            preferred_element_type=jnp.float32)

    @pl.when(k == pl.num_programs(1) - 1)
    def _():
        act = _selu(acc_ref[...]) + b_ref[...]
        out_ref[...] = (jnp.dot(act.astype(jnp.bfloat16), wc_ref[...],
                                preferred_element_type=jnp.float32)
                        + bc_ref[...])


def _gc_layer_fused(adj_p, h, w, b, *, tm, tk, wc, bc, vmem_limit):
    n_pad = adj_p.shape[0]
    f_in = h.shape[1]
    f_out = w.shape[1]
    fuse_clf = wc is not None
    out_dim = wc.shape[1] if fuse_clf else f_out
    out_dtype = jnp.float32 if fuse_clf else jnp.bfloat16

    in_specs = [
        pl.BlockSpec((tm, tk), lambda i, k: (i, k)),        # adj: streamed
        pl.BlockSpec((tk, f_in), lambda i, k: (k, 0)),      # h: streamed along k
        pl.BlockSpec((f_in, f_out), lambda i, k: (0, 0)),   # W: resident (small)
        pl.BlockSpec((1, f_out), lambda i, k: (0, 0)),      # bias: resident
    ]
    inputs = [adj_p, h, w, b]
    kernel = _fused_layer_kernel
    if fuse_clf:
        in_specs += [pl.BlockSpec((f_out, out_dim), lambda i, k: (0, 0)),
                     pl.BlockSpec((1, out_dim), lambda i, k: (0, 0))]
        inputs += [wc, bc]
        kernel = _fused_layer_clf_kernel

    return pl.pallas_call(
        kernel,
        out_shape=jax.ShapeDtypeStruct((n_pad, out_dim), out_dtype),
        grid=(n_pad // tm, n_pad // tk),
        in_specs=in_specs,
        out_specs=pl.BlockSpec((tm, out_dim), lambda i, k: (i, 0)),
        scratch_shapes=[pltpu.VMEM((tm, f_out), jnp.float32)],
        compiler_params=pltpu.CompilerParams(
            dimension_semantics=("parallel", "arbitrary"),
            vmem_limit_bytes=vmem_limit),
    )(*inputs)


# ---------------------------------------------------------------------------
# tiled path, wide-in_dim fallback (layer 1): K-tiled support matmul + a
# separate aggregation kernel with STREAMED support tiles.
# ---------------------------------------------------------------------------
def _support_kernel(h_ref, w_ref, out_ref, acc_ref):
    k = pl.program_id(1)

    @pl.when(k == 0)
    def _():
        acc_ref[...] = jnp.zeros_like(acc_ref)

    acc_ref[...] += jnp.dot(h_ref[...], w_ref[...],
                            preferred_element_type=jnp.float32)

    @pl.when(k == pl.num_programs(1) - 1)
    def _():
        out_ref[...] = acc_ref[...].astype(out_ref.dtype)


def _support_matmul(h, w, *, tm, vmem_limit):
    n_pad, f_in = h.shape
    f_out = w.shape[1]
    tkf = MIN_TILE
    for cand in (1024, 512, 256):
        if f_in % cand == 0:
            tkf = cand
            break
    return pl.pallas_call(
        _support_kernel,
        out_shape=jax.ShapeDtypeStruct((n_pad, f_out), jnp.bfloat16),
        grid=(n_pad // tm, f_in // tkf),
        in_specs=[pl.BlockSpec((tm, tkf), lambda i, k: (i, k)),
                  pl.BlockSpec((tkf, f_out), lambda i, k: (k, 0))],
        out_specs=pl.BlockSpec((tm, f_out), lambda i, k: (i, 0)),
        scratch_shapes=[pltpu.VMEM((tm, f_out), jnp.float32)],
        compiler_params=pltpu.CompilerParams(
            dimension_semantics=("parallel", "arbitrary"),
            vmem_limit_bytes=vmem_limit),
    )(h, w)


def _aggregate_kernel(adj_ref, sup_ref, b_ref, out_ref, acc_ref):
    k = pl.program_id(1)

    @pl.when(k == 0)
    def _():
        acc_ref[...] = jnp.zeros_like(acc_ref)

    acc_ref[...] += jnp.dot(adj_ref[...], sup_ref[...],
                            preferred_element_type=jnp.float32)

    @pl.when(k == pl.num_programs(1) - 1)
    def _():
        out_ref[...] = (_selu(acc_ref[...]) + b_ref[...]).astype(out_ref.dtype)


def _gc_aggregate(adj_p, sup, b, *, tm, tk, vmem_limit):
    n_pad = adj_p.shape[0]
    f_out = sup.shape[1]
    return pl.pallas_call(
        _aggregate_kernel,
        out_shape=jax.ShapeDtypeStruct((n_pad, f_out), jnp.bfloat16),
        grid=(n_pad // tm, n_pad // tk),
        in_specs=[pl.BlockSpec((tm, tk), lambda i, k: (i, k)),       # adj
                  pl.BlockSpec((tk, f_out), lambda i, k: (k, 0)),    # support
                  pl.BlockSpec((1, f_out), lambda i, k: (0, 0))],    # bias
        out_specs=pl.BlockSpec((tm, f_out), lambda i, k: (i, 0)),
        scratch_shapes=[pltpu.VMEM((tm, f_out), jnp.float32)],
        compiler_params=pltpu.CompilerParams(
            dimension_semantics=("parallel", "arbitrary"),
            vmem_limit_bytes=vmem_limit),
    )(adj_p, sup, b)


# ---------------------------------------------------------------------------
# full forward
# ---------------------------------------------------------------------------
def gcn_forward(x, adj, gc_params, clf_params, *, force_tiled=False):
    """adj may be the raw (n, n) float adjacency, or (preferred) the cached
    output of prepare_adjacency(adj)."""
    n, in_dim = x.shape
    h_dim = gc_params[0][0].shape[1]
    head_dims = [w.shape[1] for w, _ in clf_params]

    adj_p = adj if adj.dtype == jnp.bfloat16 else prepare_adjacency(adj)
    n_pad = adj_p.shape[0]

    f_in_pad = _round_up(in_dim, LANE)
    h_pad = _round_up(h_dim, LANE)
    c_pad = _round_up(sum(head_dims), LANE)

    vmem_limit = _vmem_limit_bytes()
    tm, tk = _pick_tiles(n_pad)

    h = _pad2(x, n_pad, f_in_pad, jnp.bfloat16)

    gc_padded = []
    f_in = f_in_pad
    for w, b in gc_params:
        gc_padded.append((_pad2(w, f_in, h_pad, jnp.bfloat16),
                          _pad2(b.reshape(1, -1), 1, h_pad, jnp.float32)))
        f_in = h_pad

    # concatenate all classifier heads into one lane-padded matmul
    wc = jnp.concatenate([w for w, _ in clf_params], axis=1)
    bc = jnp.concatenate([b.reshape(1, -1) for _, b in clf_params], axis=1)
    wc_p = _pad2(wc, h_pad, c_pad, jnp.bfloat16)
    bc_p = _pad2(bc, 1, c_pad, jnp.float32)

    if (not force_tiled) and _fits_small_path(n_pad, f_in_pad, h_pad, c_pad,
                                              vmem_limit):
        logits = _forward_small(adj_p, h, gc_padded, wc_p, bc_p, vmem_limit)
    else:
        n_layers = len(gc_padded)
        logits = None
        for li, (w, b) in enumerate(gc_padded):
            is_last = li == n_layers - 1
            wc_arg = wc_p if is_last else None
            bc_arg = bc_p if is_last else None
            if h.shape[1] <= FUSE_FIN_MAX or is_last:
                h = _gc_layer_fused(adj_p, h, w, b, tm=tm, tk=tk,
                                    wc=wc_arg, bc=bc_arg,
                                    vmem_limit=vmem_limit)
            else:
                sup = _support_matmul(h, w, tm=tm, vmem_limit=vmem_limit)
                h = _gc_aggregate(adj_p, sup, b, tm=tm, tk=tk,
                                  vmem_limit=vmem_limit)
            if is_last:
                logits = h

    outs, off = [], 0
    for d in head_dims:
        outs.append(logits[:n, off:off + d])
        off += d
    return outs


# ---------------------------------------------------------------------------
# parameter init matching the module (__init__ shapes / gains; biases are
# zero-filled in torch)
# ---------------------------------------------------------------------------
def _xavier_normal(key, fan_in, fan_out, gain):
    std = gain * math.sqrt(2.0 / (fan_in + fan_out))
    return std * jax.random.normal(key, (fan_in, fan_out), dtype=jnp.float32)


def init_params(key, in_dim, out_dims):
    in_dim2 = int(math.sqrt(in_dim))          # same truncation as the module
    keys = jax.random.split(key, 3 + len(out_dims))
    gc_dims = [(in_dim, in_dim2), (in_dim2, in_dim2), (in_dim2, in_dim2)]
    gc_params = [(_xavier_normal(k, fi, fo, 3.0 / 4.0),
                  jnp.zeros((fo,), jnp.float32))
                 for k, (fi, fo) in zip(keys[:3], gc_dims)]
    clf_params = [(_xavier_normal(k, in_dim2, nc, 1.0),
                   jnp.zeros((nc,), jnp.float32))
                  for k, nc in zip(keys[3:], out_dims)]
    return gc_params, clf_params


def _randomize_biases(key, gc_params, clf_params, scale=0.05):
    # torch zero-inits all biases; use small nonzero biases in the test so the
    # SELU(adj @ (h @ W)) + b placement is actually exercised.
    keys = jax.random.split(key, len(gc_params) + len(clf_params))
    ki = 0
    gcs, clfs = [], []
    for w, b in gc_params:
        gcs.append((w, scale * jax.random.normal(keys[ki], b.shape))); ki += 1
    for w, b in clf_params:
        clfs.append((w, scale * jax.random.normal(keys[ki], b.shape))); ki += 1
    return gcs, clfs


# ---------------------------------------------------------------------------
# references
# ---------------------------------------------------------------------------
def reference_f32(x, adj, gc_params, clf_params):
    h = x
    for w, b in gc_params:
        h = _selu(adj @ (h @ w)) + b.reshape(1, -1)
    return [h @ w + b.reshape(1, -1) for w, b in clf_params]


def reference_bf16(x, adj, gc_params, clf_params):
    # mirrors the kernels' bf16-input / f32-accumulate numerics
    adj_bf = adj.astype(jnp.bfloat16)
    h = x.astype(jnp.bfloat16)
    for w, b in gc_params:
        sup = jnp.dot(h, w.astype(jnp.bfloat16),
                      preferred_element_type=jnp.float32).astype(jnp.bfloat16)
        agg = jnp.dot(adj_bf, sup, preferred_element_type=jnp.float32)
        h = (_selu(agg) + b.reshape(1, -1)).astype(jnp.bfloat16)
    return [jnp.dot(h, w.astype(jnp.bfloat16),
                    preferred_element_type=jnp.float32) + b.reshape(1, -1)
            for w, b in clf_params]


if __name__ == "__main__":
    key = jax.random.PRNGKey(0)
    k1, k2, k3, k4 = jax.random.split(key, 4)

    def make_case(kx, kadj, kp, n, in_dim, out_dims):
        x = jax.random.normal(kx, (n, in_dim), dtype=jnp.float32)
        a = (jax.random.uniform(kadj, (n, n)) < 0.05).astype(jnp.float32)
        a = a + jnp.eye(n, dtype=jnp.float32)
        adj = a / jnp.sum(a, axis=1, keepdims=True)   # row-normalized dense adj
        gc_params, clf_params = init_params(kp, in_dim, out_dims)
        gc_params, clf_params = _randomize_biases(kp, gc_params, clf_params)
        return x, adj, gc_params, clf_params

    def check(outs, x, adj, gc_params, clf_params):
        refs_bf = reference_bf16(x, adj, gc_params, clf_params)
        refs_f32 = reference_f32(x, adj, gc_params, clf_params)
        for o, rb, rf in zip(outs, refs_bf, refs_f32):
            assert o.shape == rb.shape == rf.shape
            assert jnp.allclose(o, rb, atol=5e-3, rtol=5e-2), "mismatch vs bf16 ref"
            assert jnp.allclose(o, rf, atol=2e-2, rtol=1e-1), "mismatch vs f32 ref"

    # case 1: small graph -> single fully-fused kernel (adj read once)
    x, adj, gc_p, clf_p = make_case(k1, k2, k3, n=256, in_dim=64, out_dims=(4, 3))
    adj_p = prepare_adjacency(adj)            # pad + bf16-cast once, reuse below
    fwd_small = jax.jit(partial(gcn_forward, force_tiled=False))
    outs = jax.block_until_ready(fwd_small(x, adj_p, gc_p, clf_p))
    check(outs, x, adj, gc_p, clf_p)

    # case 2: same inputs forced onto the tiled per-layer path (exercises the
    # fused support+aggregate kernel and the fused classifier finalization)
    fwd_tiled = jax.jit(partial(gcn_forward, force_tiled=True))
    outs = jax.block_until_ready(fwd_tiled(x, adj_p, gc_p, clf_p))
    check(outs, x, adj, gc_p, clf_p)

    # case 3: wide in_dim -> layer 1 takes the two-pass (K-tiled support +
    # streamed-support aggregation) path on the tiled route
    x3, adj3, gc3, clf3 = make_case(k2, k4, k1, n=256, in_dim=640, out_dims=(5,))
    outs3 = jax.block_until_ready(fwd_tiled(x3, prepare_adjacency(adj3), gc3, clf3))
    check(outs3, x3, adj3, gc3, clf3)

    print("KERNEL_OK")
</pallas_src>

<mosaic_0001>
module attributes {stable_mosaic.version = 11 : i64} {
  func.func @_small_fused_kernel(%arg0: memref<256x256xbf16, #tpu.memory_space<vmem>>, %arg1: memref<256x128xbf16, #tpu.memory_space<vmem>>, %arg2: memref<128x128xbf16, #tpu.memory_space<vmem>>, %arg3: memref<1x128xf32, #tpu.memory_space<vmem>>, %arg4: memref<128x128xbf16, #tpu.memory_space<vmem>>, %arg5: memref<1x128xf32, #tpu.memory_space<vmem>>, %arg6: memref<128x128xbf16, #tpu.memory_space<vmem>>, %arg7: memref<1x128xf32, #tpu.memory_space<vmem>>, %arg8: memref<128x128xbf16, #tpu.memory_space<vmem>>, %arg9: memref<1x128xf32, #tpu.memory_space<vmem>>, %arg10: memref<256x128xf32, #tpu.memory_space<vmem>>) attributes {dimension_semantics = [], scalar_prefetch = 0 : i64, scratch_operands = 0 : i64, tpu.core_type = #tpu.core_type<tc>} {
    %c0 = arith.constant 0 : index
    %c0_0 = arith.constant 0 : index
    %0 = vector.load %arg0[%c0, %c0_0] : memref<256x256xbf16, #tpu.memory_space<vmem>>, vector<256x256xbf16>
    %c0_1 = arith.constant 0 : index
    %c0_2 = arith.constant 0 : index
    %1 = vector.load %arg1[%c0_1, %c0_2] : memref<256x128xbf16, #tpu.memory_space<vmem>>, vector<256x128xbf16>
    %c0_3 = arith.constant 0 : index
    %c0_4 = arith.constant 0 : index
    %2 = vector.load %arg2[%c0_3, %c0_4] : memref<128x128xbf16, #tpu.memory_space<vmem>>, vector<128x128xbf16>
    %cst = arith.constant dense<0.000000e+00> : vector<256x128xf32>
    %3 = tpu.matmul %1, %2, %cst {dimension_numbers = #tpu.dot_dimension_numbers<[1], [0], [0], [1], [0, 0, 1, 1], [], []>} : vector<256x128xbf16>, vector<128x128xbf16>, vector<256x128xf32> -> vector<256x128xf32>
    %4 = arith.truncf %3 : vector<256x128xf32> to vector<256x128xbf16>
    %cst_5 = arith.constant dense<0.000000e+00> : vector<256x128xf32>
    %5 = tpu.matmul %0, %4, %cst_5 {dimension_numbers = #tpu.dot_dimension_numbers<[1], [0], [0], [1], [0, 0, 1, 1], [], []>} : vector<256x256xbf16>, vector<256x128xbf16>, vector<256x128xf32> -> vector<256x128xf32>
    %cst_6 = arith.constant 0.000000e+00 : f32
    %6 = vector.broadcast %cst_6 : f32 to vector<256x128xf32>
    %7 = arith.cmpf ogt, %5, %6 : vector<256x128xf32>
    %cst_7 = arith.constant 0.000000e+00 : f32
    %8 = vector.broadcast %cst_7 : f32 to vector<256x128xf32>
    %9 = arith.minimumf %5, %8 : vector<256x128xf32>
    %10 = math.exp %9 : vector<256x128xf32>
    %cst_8 = arith.constant 1.000000e+00 : f32
    %11 = vector.broadcast %cst_8 : f32 to vector<256x128xf32>
    %12 = arith.subf %10, %11 : vector<256x128xf32>
    %cst_9 = arith.constant 1.67326319 : f32
    %13 = vector.broadcast %cst_9 : f32 to vector<256x128xf32>
    %14 = arith.mulf %13, %12 : vector<256x128xf32>
    %15 = arith.select %7, %5, %14 : vector<256x128xi1>, vector<256x128xf32>
    %cst_10 = arith.constant 1.05070102 : f32
    %16 = vector.broadcast %cst_10 : f32 to vector<256x128xf32>
    %17 = arith.mulf %16, %15 : vector<256x128xf32>
    %c0_11 = arith.constant 0 : index
    %c0_12 = arith.constant 0 : index
    %18 = vector.load %arg3[%c0_11, %c0_12] : memref<1x128xf32, #tpu.memory_space<vmem>>, vector<1x128xf32>
    %19 = vector.broadcast %18 : vector<1x128xf32> to vector<256x128xf32>
    %20 = arith.addf %17, %19 : vector<256x128xf32>
    %21 = arith.truncf %20 : vector<256x128xf32> to vector<256x128xbf16>
    %c0_13 = arith.constant 0 : index
    %c0_14 = arith.constant 0 : index
    %22 = vector.load %arg4[%c0_13, %c0_14] : memref<128x128xbf16, #tpu.memory_space<vmem>>, vector<128x128xbf16>
    %cst_15 = arith.constant dense<0.000000e+00> : vector<256x128xf32>
    %23 = tpu.matmul %21, %22, %cst_15 {dimension_numbers = #tpu.dot_dimension_numbers<[1], [0], [0], [1], [0, 0, 1, 1], [], []>} : vector<256x128xbf16>, vector<128x128xbf16>, vector<256x128xf32> -> vector<256x128xf32>
    %24 = arith.truncf %23 : vector<256x128xf32> to vector<256x128xbf16>
    %cst_16 = arith.constant dense<0.000000e+00> : vector<256x128xf32>
    %25 = tpu.matmul %0, %24, %cst_16 {dimension_numbers = #tpu.dot_dimension_numbers<[1], [0], [0], [1], [0, 0, 1, 1], [], []>} : vector<256x256xbf16>, vector<256x128xbf16>, vector<256x128xf32> -> vector<256x128xf32>
    %cst_17 = arith.constant 0.000000e+00 : f32
    %26 = vector.broadcast %cst_17 : f32 to vector<256x128xf32>
    %27 = arith.cmpf ogt, %25, %26 : vector<256x128xf32>
    %cst_18 = arith.constant 0.000000e+00 : f32
    %28 = vector.broadcast %cst_18 : f32 to vector<256x128xf32>
    %29 = arith.minimumf %25, %28 : vector<256x128xf32>
    %30 = math.exp %29 : vector<256x128xf32>
    %cst_19 = arith.constant 1.000000e+00 : f32
    %31 = vector.broadcast %cst_19 : f32 to vector<256x128xf32>
    %32 = arith.subf %30, %31 : vector<256x128xf32>
    %cst_20 = arith.constant 1.67326319 : f32
    %33 = vector.broadcast %cst_20 : f32 to vector<256x128xf32>
    %34 = arith.mulf %33, %32 : vector<256x128xf32>
    %35 = arith.select %27, %25, %34 : vector<256x128xi1>, vector<256x128xf32>
    %cst_21 = arith.constant 1.05070102 : f32
    %36 = vector.broadcast %cst_21 : f32 to vector<256x128xf32>
    %37 = arith.mulf %36, %35 : vector<256x128xf32>
    %c0_22 = arith.constant 0 : index
    %c0_23 = arith.constant 0 : index
    %38 = vector.load %arg5[%c0_22, %c0_23] : memref<1x128xf32, #tpu.memory_space<vmem>>, vector<1x128xf32>
    %39 = vector.broadcast %38 : vector<1x128xf32> to vector<256x128xf32>
    %40 = arith.addf %37, %39 : vector<256x128xf32>
    %41 = arith.truncf %40 : vector<256x128xf32> to vector<256x128xbf16>
    %c0_24 = arith.constant 0 : index
    %c0_25 = arith.constant 0 : index
    %42 = vector.load %arg6[%c0_24, %c0_25] : memref<128x128xbf16, #tpu.memory_space<vmem>>, vector<128x128xbf16>
    %cst_26 = arith.constant dense<0.000000e+00> : vector<256x128xf32>
    %43 = tpu.matmul %41, %42, %cst_26 {dimension_numbers = #tpu.dot_dimension_numbers<[1], [0], [0], [1], [0, 0, 1, 1], [], []>} : vector<256x128xbf16>, vector<128x128xbf16>, vector<256x128xf32> -> vector<256x128xf32>
    %44 = arith.truncf %43 : vector<256x128xf32> to vector<256x128xbf16>
    %cst_27 = arith.constant dense<0.000000e+00> : vector<256x128xf32>
    %45 = tpu.matmul %0, %44, %cst_27 {dimension_numbers = #tpu.dot_dimension_numbers<[1], [0], [0], [1], [0, 0, 1, 1], [], []>} : vector<256x256xbf16>, vector<256x128xbf16>, vector<256x128xf32> -> vector<256x128xf32>
    %cst_28 = arith.constant 0.000000e+00 : f32
    %46 = vector.broadcast %cst_28 : f32 to vector<256x128xf32>
    %47 = arith.cmpf ogt, %45, %46 : vector<256x128xf32>
    %cst_29 = arith.constant 0.000000e+00 : f32
    %48 = vector.broadcast %cst_29 : f32 to vector<256x128xf32>
    %49 = arith.minimumf %45, %48 : vector<256x128xf32>
    %50 = math.exp %49 : vector<256x128xf32>
    %cst_30 = arith.constant 1.000000e+00 : f32
    %51 = vector.broadcast %cst_30 : f32 to vector<256x128xf32>
    %52 = arith.subf %50, %51 : vector<256x128xf32>
    %cst_31 = arith.constant 1.67326319 : f32
    %53 = vector.broadcast %cst_31 : f32 to vector<256x128xf32>
    %54 = arith.mulf %53, %52 : vector<256x128xf32>
    %55 = arith.select %47, %45, %54 : vector<256x128xi1>, vector<256x128xf32>
    %cst_32 = arith.constant 1.05070102 : f32
    %56 = vector.broadcast %cst_32 : f32 to vector<256x128xf32>
    %57 = arith.mulf %56, %55 : vector<256x128xf32>
    %c0_33 = arith.constant 0 : index
    %c0_34 = arith.constant 0 : index
    %58 = vector.load %arg7[%c0_33, %c0_34] : memref<1x128xf32, #tpu.memory_space<vmem>>, vector<1x128xf32>
    %59 = vector.broadcast %58 : vector<1x128xf32> to vector<256x128xf32>
    %60 = arith.addf %57, %59 : vector<256x128xf32>
    %61 = arith.truncf %60 : vector<256x128xf32> to vector<256x128xbf16>
    %c0_35 = arith.constant 0 : index
    %c0_36 = arith.constant 0 : index
    %62 = vector.load %arg8[%c0_35, %c0_36] : memref<128x128xbf16, #tpu.memory_space<vmem>>, vector<128x128xbf16>
    %cst_37 = arith.constant dense<0.000000e+00> : vector<256x128xf32>
    %63 = tpu.matmul %61, %62, %cst_37 {dimension_numbers = #tpu.dot_dimension_numbers<[1], [0], [0], [1], [0, 0, 1, 1], [], []>} : vector<256x128xbf16>, vector<128x128xbf16>, vector<256x128xf32> -> vector<256x128xf32>
    %c0_38 = arith.constant 0 : index
    %c0_39 = arith.constant 0 : index
    %64 = vector.load %arg9[%c0_38, %c0_39] : memref<1x128xf32, #tpu.memory_space<vmem>>, vector<1x128xf32>
    %65 = vector.broadcast %64 : vector<1x128xf32> to vector<256x128xf32>
    %66 = arith.addf %63, %65 : vector<256x128xf32>
    %c0_40 = arith.constant 0 : index
    %c0_41 = arith.constant 0 : index
    %67 = vector.load %arg10[%c0_40, %c0_41] : memref<256x128xf32, #tpu.memory_space<vmem>>, vector<256x128xf32>
    tpu.vector_store %arg10[%c0_40, %c0_41], %66 {strides = array<i32>} : memref<256x128xf32, #tpu.memory_space<vmem>>, vector<256x128xf32>,
    return
  }
}

</mosaic_0001>

<llo_original>
// kernel: gcn_forward.1
$region0: #{gcn_forward.1}
  #allocation0 [shape = 'u32[]', space=smem, size = 0x4, offset = 0x4, fixed_abs, tag = 'smem constant byte address 0x4 - core index']
  #allocation1 [shape = 'u32[144,128]{1,0:T(1,128)}', space=vmem, size = 0x12000, scoped, tag = 'internal scratch']
  %s0 = inlined_call_operand.vmem [shape: bf16[256,256], index: 0, kind: input, shape index: {}]
  %s1 = inlined_call_operand.vmem [shape: bf16[256,128], index: 1, kind: input, shape index: {}]
  %s2 = inlined_call_operand.vmem [shape: bf16[128,128], index: 2, kind: input, shape index: {}]
  %s3 = inlined_call_operand.vmem [shape: f32[1,128], index: 3, kind: input, shape index: {}]
  %s4 = inlined_call_operand.vmem [shape: bf16[128,128], index: 4, kind: input, shape index: {}]
  %s5 = inlined_call_operand.vmem [shape: f32[1,128], index: 5, kind: input, shape index: {}]
  %s6 = inlined_call_operand.vmem [shape: bf16[128,128], index: 6, kind: input, shape index: {}]
  %s7 = inlined_call_operand.vmem [shape: f32[1,128], index: 7, kind: input, shape index: {}]
  %s8 = inlined_call_operand.vmem [shape: bf16[128,128], index: 8, kind: input, shape index: {}]
  %s9 = inlined_call_operand.vmem [shape: f32[1,128], index: 9, kind: input, shape index: {}]
  %s10 = inlined_call_operand.vmem [shape: f32[256,128], index: 10, kind: output, shape index: {}]
  %s11 = sld [smem:[#allocation0]]
  $region50: #{gcn_forward.1} parent=0
    _
  %s13 = ssub.s32 1, %s11
  %s14 = scalar_select 0, %s13, %s11
  // Predicated region
  $region2: #{gcn_forward.1} parent=0 // pred_check
    _
  $region3: #{gcn_forward.1} parent=0 // pred_check_branch
    %16 = sbr.rel (0) target = $region5
  $region4: #{gcn_forward.1} parent=0 // pred_region
    _
  $region5: #{gcn_forward.1} parent=0 // pred_fallthru
    _
  // Predicated region
  $region6: #{gcn_forward.1} parent=0 // pred_check
    _
  $region7: #{gcn_forward.1} parent=0 // pred_check_branch
    %18 = sbr.rel (0) target = $region9
  $region8: #{gcn_forward.1} parent=0 // pred_region
    _
  $region9: #{gcn_forward.1} parent=0 // pred_fallthru
    _
  // Predicated region
  $region10: #{gcn_forward.1} parent=0 // pred_check
    _
  $region11: #{gcn_forward.1} parent=0 // pred_check_branch
    %20 = sbr.rel (0) target = $region13
  $region12: #{gcn_forward.1} parent=0 // pred_region
    _
  $region13: #{gcn_forward.1} parent=0 // pred_fallthru
    _
  // Predicated region
  $region14: #{gcn_forward.1} parent=0 // pred_check
    _
  $region15: #{gcn_forward.1} parent=0 // pred_check_branch
    %22 = sbr.rel (0) target = $region17
  $region16: #{gcn_forward.1} parent=0 // pred_region
    _
  $region17: #{gcn_forward.1} parent=0 // pred_fallthru
    _
  // Predicated region
  $region18: #{gcn_forward.1} parent=0 // pred_check
    _
  $region19: #{gcn_forward.1} parent=0 // pred_check_branch
    %24 = sbr.rel (0) target = $region21
  $region20: #{gcn_forward.1} parent=0 // pred_region
    _
  $region21: #{gcn_forward.1} parent=0 // pred_fallthru
    _
  // Predicated region
  $region22: #{gcn_forward.1} parent=0 // pred_check
    _
  $region23: #{gcn_forward.1} parent=0 // pred_check_branch
    %26 = sbr.rel (0) target = $region25
  $region24: #{gcn_forward.1} parent=0 // pred_region
    _
  $region25: #{gcn_forward.1} parent=0 // pred_fallthru
    _
  // Predicated region
  $region26: #{gcn_forward.1} parent=0 // pred_check
    _
  $region27: #{gcn_forward.1} parent=0 // pred_check_branch
    %28 = sbr.rel (0) target = $region29
  $region28: #{gcn_forward.1} parent=0 // pred_region
    _
  $region29: #{gcn_forward.1} parent=0 // pred_fallthru
    _
  // Predicated region
  $region30: #{gcn_forward.1} parent=0 // pred_check
    _
  $region31: #{gcn_forward.1} parent=0 // pred_check_branch
    %30 = sbr.rel (0) target = $region33
  $region32: #{gcn_forward.1} parent=0 // pred_region
    _
  $region33: #{gcn_forward.1} parent=0 // pred_fallthru
    _
  // Predicated region
  $region34: #{gcn_forward.1} parent=0 // pred_check
    _
  $region35: #{gcn_forward.1} parent=0 // pred_check_branch
    %32 = sbr.rel (0) target = $region37
  $region36: #{gcn_forward.1} parent=0 // pred_region
    _
  $region37: #{gcn_forward.1} parent=0 // pred_fallthru
    _
  // Predicated region
  $region38: #{gcn_forward.1} parent=0 // pred_check
    _
  $region39: #{gcn_forward.1} parent=0 // pred_check_branch
    %34 = sbr.rel (0) target = $region41
  $region40: #{gcn_forward.1} parent=0 // pred_region
    _
  $region41: #{gcn_forward.1} parent=0 // pred_fallthru
    _
  %v36 = vld [vmem:[%s0] sm:$0xff]
  %v37 = vld [vmem:[%s0 + $0x8] sm:$0xff]
  %v38 = vld [vmem:[%s0 + $0x10] sm:$0xff]
  %v39 = vld [vmem:[%s0 + $0x18] sm:$0xff]
  %v40 = vld [vmem:[%s0 + $0x20] sm:$0xff]
  %v41 = vld [vmem:[%s0 + $0x28] sm:$0xff]
  %v42 = vld [vmem:[%s0 + $0x30] sm:$0xff]
  %v43 = vld [vmem:[%s0 + $0x38] sm:$0xff]
  %v44 = vld [vmem:[%s0 + $0x40] sm:$0xff]
  %v45 = vld [vmem:[%s0 + $0x48] sm:$0xff]
  %v46 = vld [vmem:[%s0 + $0x50] sm:$0xff]
  %v47 = vld [vmem:[%s0 + $0x58] sm:$0xff]
  %v48 = vld [vmem:[%s0 + $0x60] sm:$0xff]
  %v49 = vld [vmem:[%s0 + $0x68] sm:$0xff]
  %v50 = vld [vmem:[%s0 + $0x70] sm:$0xff]
  %v51 = vld [vmem:[%s0 + $0x78] sm:$0xff]
  %v52 = vld [vmem:[%s0 + $0x80] sm:$0xff]
  %v53 = vld [vmem:[%s0 + $0x88] sm:$0xff]
  %v54 = vld [vmem:[%s0 + $0x90] sm:$0xff]
  %v55 = vld [vmem:[%s0 + $0x98] sm:$0xff]
  %v56 = vld [vmem:[%s0 + $0xa0] sm:$0xff]
  %v57 = vld [vmem:[%s0 + $0xa8] sm:$0xff]
  %v58 = vld [vmem:[%s0 + $0xb0] sm:$0xff]
  %v59 = vld [vmem:[%s0 + $0xb8] sm:$0xff]
  %v60 = vld [vmem:[%s0 + $0xc0] sm:$0xff]
  %v61 = vld [vmem:[%s0 + $0xc8] sm:$0xff]
  %v62 = vld [vmem:[%s0 + $0xd0] sm:$0xff]
  %v63 = vld [vmem:[%s0 + $0xd8] sm:$0xff]
  %v64 = vld [vmem:[%s0 + $0xe0] sm:$0xff]
  %v65 = vld [vmem:[%s0 + $0xe8] sm:$0xff]
  %v66 = vld [vmem:[%s0 + $0xf0] sm:$0xff]
  %v67 = vld [vmem:[%s0 + $0xf8] sm:$0xff]
  %v68 = vld [vmem:[%s1] sm:$0xf]
  %v69 = vld [vmem:[%s1 + $0x4] sm:$0xf]
  %v70 = vld [vmem:[%s1 + $0x8] sm:$0xf]
  %v71 = vld [vmem:[%s1 + $0xc] sm:$0xf]
  %v72 = vld [vmem:[%s1 + $0x10] sm:$0xf]
  %v73 = vld [vmem:[%s1 + $0x14] sm:$0xf]
  %v74 = vld [vmem:[%s1 + $0x18] sm:$0xf]
  %v75 = vld [vmem:[%s1 + $0x1c] sm:$0xf]
  %v76 = vld [vmem:[%s1 + $0x20] sm:$0xf]
  %v77 = vld [vmem:[%s1 + $0x24] sm:$0xf]
  %v78 = vld [vmem:[%s1 + $0x28] sm:$0xf]
  %v79 = vld [vmem:[%s1 + $0x2c] sm:$0xf]
  %v80 = vld [vmem:[%s1 + $0x30] sm:$0xf]
  %v81 = vld [vmem:[%s1 + $0x34] sm:$0xf]
  %v82 = vld [vmem:[%s1 + $0x38] sm:$0xf]
  %v83 = vld [vmem:[%s1 + $0x3c] sm:$0xf]
  %v84 = vld [vmem:[%s1 + $0x40] sm:$0xf]
  %v85 = vld [vmem:[%s1 + $0x44] sm:$0xf]
  %v86 = vld [vmem:[%s1 + $0x48] sm:$0xf]
  %v87 = vld [vmem:[%s1 + $0x4c] sm:$0xf]
  %v88 = vld [vmem:[%s1 + $0x50] sm:$0xf]
  %v89 = vld [vmem:[%s1 + $0x54] sm:$0xf]
  %v90 = vld [vmem:[%s1 + $0x58] sm:$0xf]
  %v91 = vld [vmem:[%s1 + $0x5c] sm:$0xf]
  %v92 = vld [vmem:[%s1 + $0x60] sm:$0xf]
  %v93 = vld [vmem:[%s1 + $0x64] sm:$0xf]
  %v94 = vld [vmem:[%s1 + $0x68] sm:$0xf]
  %v95 = vld [vmem:[%s1 + $0x6c] sm:$0xf]
  %v96 = vld [vmem:[%s1 + $0x70] sm:$0xf]
  %v97 = vld [vmem:[%s1 + $0x74] sm:$0xf]
  %v98 = vld [vmem:[%s1 + $0x78] sm:$0xf]
  %v99 = vld [vmem:[%s1 + $0x7c] sm:$0xf]
  %v100 = vld [vmem:[%s2] sm:$0xf]
  %v101 = vld [vmem:[%s2 + $0x4] sm:$0xf]
  %v102 = vld [vmem:[%s2 + $0x8] sm:$0xf]
  %v103 = vld [vmem:[%s2 + $0xc] sm:$0xf]
  %v104 = vld [vmem:[%s2 + $0x10] sm:$0xf]
  %v105 = vld [vmem:[%s2 + $0x14] sm:$0xf]
  %v106 = vld [vmem:[%s2 + $0x18] sm:$0xf]
  %v107 = vld [vmem:[%s2 + $0x1c] sm:$0xf]
  %v108 = vld [vmem:[%s2 + $0x20] sm:$0xf]
  %v109 = vld [vmem:[%s2 + $0x24] sm:$0xf]
  %v110 = vld [vmem:[%s2 + $0x28] sm:$0xf]
  %v111 = vld [vmem:[%s2 + $0x2c] sm:$0xf]
  %v112 = vld [vmem:[%s2 + $0x30] sm:$0xf]
  %v113 = vld [vmem:[%s2 + $0x34] sm:$0xf]
  %v114 = vld [vmem:[%s2 + $0x38] sm:$0xf]
  %v115 = vld [vmem:[%s2 + $0x3c] sm:$0xf]
  %v148 = vunpack.c.l.b16 %v68
  %v149 = vunpack.c.l.b16 %v69
  %v150 = vunpack.c.l.b16 %v70
  %v151 = vunpack.c.l.b16 %v71
  %v152 = vunpack.c.l.b16 %v72
  %v153 = vunpack.c.l.b16 %v73
  %v154 = vunpack.c.l.b16 %v74
  %v155 = vunpack.c.l.b16 %v75
  %v156 = vunpack.c.l.b16 %v76
  %v157 = vunpack.c.l.b16 %v77
  %v158 = vunpack.c.l.b16 %v78
  %v159 = vunpack.c.l.b16 %v79
  %v160 = vunpack.c.l.b16 %v80
  %v161 = vunpack.c.l.b16 %v81
  %v162 = vunpack.c.l.b16 %v82
  %v163 = vunpack.c.l.b16 %v83
  %v164 = vunpack.c.l.b16 %v84
  %v165 = vunpack.c.l.b16 %v85
  %v166 = vunpack.c.l.b16 %v86
  %v167 = vunpack.c.l.b16 %v87
  %v168 = vunpack.c.l.b16 %v88
  %v169 = vunpack.c.l.b16 %v89
  %v170 = vunpack.c.l.b16 %v90
  %v171 = vunpack.c.l.b16 %v91
  %v172 = vunpack.c.l.b16 %v92
  %v173 = vunpack.c.l.b16 %v93
  %v174 = vunpack.c.l.b16 %v94
  %v175 = vunpack.c.l.b16 %v95
  %v176 = vunpack.c.l.b16 %v96
  %v177 = vunpack.c.l.b16 %v97
  %v178 = vunpack.c.l.b16 %v98
  %v179 = vunpack.c.l.b16 %v99
  %v180 = vpack.c.b16 %v149, %v148
  %v181 = vpack.c.b16 %v151, %v150
  %v182 = vpack.c.b16 %v153, %v152
  %v183 = vpack.c.b16 %v155, %v154
  %v184 = vpack.c.b16 %v157, %v156
  %v185 = vpack.c.b16 %v159, %v158
  %v186 = vpack.c.b16 %v161, %v160
  %v187 = vpack.c.b16 %v163, %v162
  %v188 = vpack.c.b16 %v165, %v164
  %v189 = vpack.c.b16 %v167, %v166
  %v190 = vpack.c.b16 %v169, %v168
  %v191 = vpack.c.b16 %v171, %v170
  %v192 = vpack.c.b16 %v173, %v172
  %v193 = vpack.c.b16 %v175, %v174
  %v194 = vpack.c.b16 %v177, %v176
  %v195 = vpack.c.b16 %v179, %v178
  %v228 = vunpack.c.l.b16 %v100
  %v229 = vunpack.c.l.b16 %v101
  %v230 = vunpack.c.l.b16 %v102
  %v231 = vunpack.c.l.b16 %v103
  %v232 = vunpack.c.l.b16 %v104
  %v233 = vunpack.c.l.b16 %v105
  %v234 = vunpack.c.l.b16 %v106
  %v235 = vunpack.c.l.b16 %v107
  %v236 = vunpack.c.l.b16 %v108
  %v237 = vunpack.c.l.b16 %v109
  %v238 = vunpack.c.l.b16 %v110
  %v239 = vunpack.c.l.b16 %v111
  %v240 = vunpack.c.l.b16 %v112
  %v241 = vunpack.c.l.b16 %v113
  %v242 = vunpack.c.l.b16 %v114
  %v243 = vunpack.c.l.b16 %v115
  %v244 = vpack.c.b16 %v229, %v228
  %v245 = vpack.c.b16 %v231, %v230
  %v246 = vpack.c.b16 %v233, %v232
  %v247 = vpack.c.b16 %v235, %v234
  %v248 = vpack.c.b16 %v237, %v236
  %v249 = vpack.c.b16 %v239, %v238
  %v250 = vpack.c.b16 %v241, %v240
  %v251 = vpack.c.b16 %v243, %v242
  %260 = vmatprep.subr.bf16.mxu0 0
  %261 = vmatpush1.bf16.msra.mxu0 %v244
  %262 = vmatprep.subr.bf16.mxu0 0
  %263 = vmatpush1.bf16.msra.mxu0 %v245
  %264 = vmatprep.subr.bf16.mxu0 0
  %265 = vmatpush1.bf16.msra.mxu0 %v246
  %266 = vmatprep.subr.bf16.mxu0 0
  %267 = vmatpush1.bf16.msra.mxu0 %v247
  %268 = vmatprep.subr.bf16.mxu0 0
  %269 = vmatpush1.bf16.msra.mxu0 %v248
  %270 = vmatprep.subr.bf16.mxu0 0
  %271 = vmatpush1.bf16.msra.mxu0 %v249
  %272 = vmatprep.subr.bf16.mxu0 0
  %273 = vmatpush1.bf16.msra.mxu0 %v250
  %274 = vmatprep.subr.bf16.mxu0 0
  %275 = vmatpush1.bf16.msra.mxu0 %v251
  %276 = vmatprep.subr.bf16.mxu0 0
  %277 = vmatpush1.bf16.msra.mxu0 0
  %278 = vmatprep.subr.bf16.mxu0 0
  %279 = vmatpush1.bf16.msra.mxu0 0
  %280 = vmatprep.subr.bf16.mxu0 0
  %281 = vmatpush1.bf16.msra.mxu0 0
  %282 = vmatprep.subr.bf16.mxu0 0
  %283 = vmatpush1.bf16.msra.mxu0 0
  %284 = vmatprep.subr.bf16.mxu0 0
  %285 = vmatpush1.bf16.msra.mxu0 0
  %286 = vmatprep.subr.bf16.mxu0 0
  %287 = vmatpush1.bf16.msra.mxu0 0
  %288 = vmatprep.subr.bf16.mxu0 0
  %289 = vmatpush1.bf16.msra.mxu0 0
  %290 = vmatprep.subr.bf16.mxu0 0
  %291 = vmatpush1.bf16.msra.mxu0 0
  %292 = vmatprep.mubr.bf16.mxu0 0
  %293 = vmatmul.mubr.bf16.gmra.mrb[0].mxu0 %v180
  %v294 = vpop.f32.mrb[0].mxu0
  %v295 = vadd.f32 0.0, %v294
  %v296 = vpop.f32.mrb[0].mxu0
  %v297 = vpop.f32.mrb[0].mxu0
  %v298 = vadd.f32 0.0, %v297
  %v299 = vpop.f32.mrb[0].mxu0
  %300 = vmatprep.mubr.bf16.mxu0 0
  %301 = vmatmul.mubr.bf16.gmra.mrb[0].mxu0 %v181
  %v302 = vpop.f32.mrb[0].mxu0
  %v303 = vadd.f32 0.0, %v302
  %v304 = vpop.f32.mrb[0].mxu0
  %v305 = vpop.f32.mrb[0].mxu0
  %v306 = vadd.f32 0.0, %v305
  %v307 = vpop.f32.mrb[0].mxu0
  %308 = vmatprep.mubr.bf16.mxu0 0
  %309 = vmatmul.mubr.bf16.gmra.mrb[0].mxu0 %v182
  %v310 = vpop.f32.mrb[0].mxu0
  %v311 = vadd.f32 0.0, %v310
  %v312 = vpop.f32.mrb[0].mxu0
  %v313 = vpop.f32.mrb[0].mxu0
  %v314 = vadd.f32 0.0, %v313
  %v315 = vpop.f32.mrb[0].mxu0
  %316 = vmatprep.mubr.bf16.mxu0 0
  %317 = vmatmul.mubr.bf16.gmra.mrb[0].mxu0 %v183
  %v318 = vpop.f32.mrb[0].mxu0
  %v319 = vadd.f32 0.0, %v318
  %v320 = vpop.f32.mrb[0].mxu0
  %v321 = vpop.f32.mrb[0].mxu0
  %v322 = vadd.f32 0.0, %v321
  %v323 = vpop.f32.mrb[0].mxu0
  %324 = vmatprep.mubr.bf16.mxu0 0
  %325 = vmatmul.mubr.bf16.gmra.mrb[0].mxu0 %v184
  %v326 = vpop.f32.mrb[0].mxu0
  %v327 = vadd.f32 0.0, %v326
  %v328 = vpop.f32.mrb[0].mxu0
  %v329 = vpop.f32.mrb[0].mxu0
  %v330 = vadd.f32 0.0, %v329
  %v331 = vpop.f32.mrb[0].mxu0
  %332 = vmatprep.mubr.bf16.mxu0 0
  %333 = vmatmul.mubr.bf16.gmra.mrb[0].mxu0 %v185
  %v334 = vpop.f32.mrb[0].mxu0
  %v335 = vadd.f32 0.0, %v334
  %v336 = vpop.f32.mrb[0].mxu0
  %v337 = vpop.f32.mrb[0].mxu0
  %v338 = vadd.f32 0.0, %v337
  %v339 = vpop.f32.mrb[0].mxu0
  %340 = vmatprep.mubr.bf16.mxu0 0
  %341 = vmatmul.mubr.bf16.gmra.mrb[0].mxu0 %v186
  %v342 = vpop.f32.mrb[0].mxu0
  %v343 = vadd.f32 0.0, %v342
  %v344 = vpop.f32.mrb[0].mxu0
  %v345 = vpop.f32.mrb[0].mxu0
  %v346 = vadd.f32 0.0, %v345
  %v347 = vpop.f32.mrb[0].mxu0
  %348 = vmatprep.mubr.bf16.mxu0 0
  %349 = vmatmul.mubr.bf16.gmra.mrb[0].mxu0 %v187
  %v350 = vpop.f32.mrb[0].mxu0
  %v351 = vadd.f32 0.0, %v350
  %v352 = vpop.f32.mrb[0].mxu0
  %v353 = vpop.f32.mrb[0].mxu0
  %v354 = vadd.f32 0.0, %v353
  %v355 = vpop.f32.mrb[0].mxu0
  %356 = vmatprep.mubr.bf16.mxu0 0
  %357 = vmatmul.mubr.bf16.gmra.mrb[0].mxu0 %v188
  %v358 = vpop.f32.mrb[0].mxu0
  %v359 = vadd.f32 0.0, %v358
  %v360 = vpop.f32.mrb[0].mxu0
  %v361 = vpop.f32.mrb[0].mxu0
  %v362 = vadd.f32 0.0, %v361
  %v363 = vpop.f32.mrb[0].mxu0
  %364 = vmatprep.mubr.bf16.mxu0 0
  %365 = vmatmul.mubr.bf16.gmra.mrb[0].mxu0 %v189
  %v366 = vpop.f32.mrb[0].mxu0
  %v367 = vadd.f32 0.0, %v366
  %v368 = vpop.f32.mrb[0].mxu0
  %v369 = vpop.f32.mrb[0].mxu0
  %v370 = vadd.f32 0.0, %v369
  %v371 = vpop.f32.mrb[0].mxu0
  %372 = vmatprep.mubr.bf16.mxu0 0
  %373 = vmatmul.mubr.bf16.gmra.mrb[0].mxu0 %v190
  %v374 = vpop.f32.mrb[0].mxu0
  %v375 = vadd.f32 0.0, %v374
  %v376 = vpop.f32.mrb[0].mxu0
  %v377 = vpop.f32.mrb[0].mxu0
  %v378 = vadd.f32 0.0, %v377
  %v379 = vpop.f32.mrb[0].mxu0
  %380 = vmatprep.mubr.bf16.mxu0 0
  %381 = vmatmul.mubr.bf16.gmra.mrb[0].mxu0 %v191
  %v382 = vpop.f32.mrb[0].mxu0
  %v383 = vadd.f32 0.0, %v382
  %v384 = vpop.f32.mrb[0].mxu0
  %v385 = vpop.f32.mrb[0].mxu0
  %v386 = vadd.f32 0.0, %v385
  %v387 = vpop.f32.mrb[0].mxu0
  %388 = vmatprep.mubr.bf16.mxu0 0
  %389 = vmatmul.mubr.bf16.gmra.mrb[0].mxu0 %v192
  %v390 = vpop.f32.mrb[0].mxu0
  %v391 = vadd.f32 0.0, %v390
  %v392 = vpop.f32.mrb[0].mxu0
  %v393 = vpop.f32.mrb[0].mxu0
  %v394 = vadd.f32 0.0, %v393
  %v395 = vpop.f32.mrb[0].mxu0
  %396 = vmatprep.mubr.bf16.mxu0 0
  %397 = vmatmul.mubr.bf16.gmra.mrb[0].mxu0 %v193
  %v398 = vpop.f32.mrb[0].mxu0
  %v399 = vadd.f32 0.0, %v398
  %v400 = vpop.f32.mrb[0].mxu0
  %v401 = vpop.f32.mrb[0].mxu0
  %v402 = vadd.f32 0.0, %v401
  %v403 = vpop.f32.mrb[0].mxu0
  %404 = vmatprep.mubr.bf16.mxu0 0
  %405 = vmatmul.mubr.bf16.gmra.mrb[0].mxu0 %v194
  %v406 = vpop.f32.mrb[0].mxu0
  %v407 = vadd.f32 0.0, %v406
  %v408 = vpop.f32.mrb[0].mxu0
  %v409 = vpop.f32.mrb[0].mxu0
  %v410 = vadd.f32 0.0, %v409
  %v411 = vpop.f32.mrb[0].mxu0
  %412 = vmatprep.mubr.bf16.mxu0 0
  %413 = vmatmul.mubr.bf16.gmra.mrb[0].mxu0 %v195
  %v414 = vpop.f32.mrb[0].mxu0
  %v415 = vadd.f32 0.0, %v414
  %v416 = vpop.f32.mrb[0].mxu0
  %v417 = vpop.f32.mrb[0].mxu0
  %v418 = vadd.f32 0.0, %v417
  %v419 = vpop.f32.mrb[0].mxu0
  %420 = vdwg.mxu0
  %v421 = vpack.c.bf16 %v298, %v295
  %v422 = vpack.c.bf16 %v306, %v303
  %v423 = vpack.c.bf16 %v314, %v311
  %v424 = vpack.c.bf16 %v322, %v319
  %v425 = vpack.c.bf16 %v330, %v327
  %v426 = vpack.c.bf16 %v338, %v335
  %v427 = vpack.c.bf16 %v346, %v343
  %v428 = vpack.c.bf16 %v354, %v351
  %v429 = vpack.c.bf16 %v362, %v359
  %v430 = vpack.c.bf16 %v370, %v367
  %v431 = vpack.c.bf16 %v378, %v375
  %v432 = vpack.c.bf16 %v386, %v383
  %v433 = vpack.c.bf16 %v394, %v391
  %v434 = vpack.c.bf16 %v402, %v399
  %v435 = vpack.c.bf16 %v410, %v407
  %v436 = vpack.c.bf16 %v418, %v415
  %v469 = vunpack.c.l.b16 %v36
  %v470 = vunpack.c.h.b16 %v36
  %v471 = vunpack.c.l.b16 %v37
  %v472 = vunpack.c.h.b16 %v37
  %v473 = vunpack.c.l.b16 %v38
  %v474 = vunpack.c.h.b16 %v38
  %v475 = vunpack.c.l.b16 %v39
  %v476 = vunpack.c.h.b16 %v39
  %v477 = vunpack.c.l.b16 %v40
  %v478 = vunpack.c.h.b16 %v40
  %v479 = vunpack.c.l.b16 %v41
  %v480 = vunpack.c.h.b16 %v41
  %v481 = vunpack.c.l.b16 %v42
  %v482 = vunpack.c.h.b16 %v42
  %v483 = vunpack.c.l.b16 %v43
  %v484 = vunpack.c.h.b16 %v43
  %v485 = vunpack.c.l.b16 %v44
  %v486 = vunpack.c.h.b16 %v44
  %v487 = vunpack.c.l.b16 %v45
  %v488 = vunpack.c.h.b16 %v45
  %v489 = vunpack.c.l.b16 %v46
  %v490 = vunpack.c.h.b16 %v46
  %v491 = vunpack.c.l.b16 %v47
  %v492 = vunpack.c.h.b16 %v47
  %v493 = vunpack.c.l.b16 %v48
  %v494 = vunpack.c.h.b16 %v48
  %v495 = vunpack.c.l.b16 %v49
  %v496 = vunpack.c.h.b16 %v49
  %v497 = vunpack.c.l.b16 %v50
  %v498 = vunpack.c.h.b16 %v50
  %v499 = vunpack.c.l.b16 %v51
  %v500 = vunpack.c.h.b16 %v51
  %v501 = vunpack.c.l.b16 %v52
  %v502 = vunpack.c.h.b16 %v52
  %v503 = vunpack.c.l.b16 %v53
  %v504 = vunpack.c.h.b16 %v53
  %v505 = vunpack.c.l.b16 %v54
  %v506 = vunpack.c.h.b16 %v54
  %v507 = vunpack.c.l.b16 %v55
  %v508 = vunpack.c.h.b16 %v55
  %v509 = vunpack.c.l.b16 %v56
  %v510 = vunpack.c.h.b16 %v56
  %v511 = vunpack.c.l.b16 %v57
  %v512 = vunpack.c.h.b16 %v57
  %v513 = vunpack.c.l.b16 %v58
  %v514 = vunpack.c.h.b16 %v58
  %v515 = vunpack.c.l.b16 %v59
  %v516 = vunpack.c.h.b16 %v59
  %v517 = vunpack.c.l.b16 %v60
  %v518 = vunpack.c.h.b16 %v60
  %v519 = vunpack.c.l.b16 %v61
  %v520 = vunpack.c.h.b16 %v61
  %v521 = vunpack.c.l.b16 %v62
  %v522 = vunpack.c.h.b16 %v62
  %v523 = vunpack.c.l.b16 %v63
  %v524 = vunpack.c.h.b16 %v63
  %v525 = vunpack.c.l.b16 %v64
  %v526 = vunpack.c.h.b16 %v64
  %v527 = vunpack.c.l.b16 %v65
  %v528 = vunpack.c.h.b16 %v65
  %v529 = vunpack.c.l.b16 %v66
  %v530 = vunpack.c.h.b16 %v66
  %v531 = vunpack.c.l.b16 %v67
  %v532 = vunpack.c.h.b16 %v67
  %v533 = vpack.c.b16 %v471, %v469
  %v534 = vpack.c.b16 %v472, %v470
  %v535 = vpack.c.b16 %v475, %v473
  %v536 = vpack.c.b16 %v476, %v474
  %v537 = vpack.c.b16 %v479, %v477
  %v538 = vpack.c.b16 %v480, %v478
  %v539 = vpack.c.b16 %v483, %v481
  %v540 = vpack.c.b16 %v484, %v482
  %v541 = vpack.c.b16 %v487, %v485
  %v542 = vpack.c.b16 %v488, %v486
  %v543 = vpack.c.b16 %v491, %v489
  %v544 = vpack.c.b16 %v492, %v490
  %v545 = vpack.c.b16 %v495, %v493
  %v546 = vpack.c.b16 %v496, %v494
  %v547 = vpack.c.b16 %v499, %v497
  %v548 = vpack.c.b16 %v500, %v498
  %v549 = vpack.c.b16 %v503, %v501
  %v550 = vpack.c.b16 %v504, %v502
  %v551 = vpack.c.b16 %v507, %v505
  %v552 = vpack.c.b16 %v508, %v506
  %v553 = vpack.c.b16 %v511, %v509
  %v554 = vpack.c.b16 %v512, %v510
  %v555 = vpack.c.b16 %v515, %v513
  %v556 = vpack.c.b16 %v516, %v514
  %v557 = vpack.c.b16 %v519, %v517
  %v558 = vpack.c.b16 %v520, %v518
  %v559 = vpack.c.b16 %v523, %v521
  %v560 = vpack.c.b16 %v524, %v522
  %v561 = vpack.c.b16 %v527, %v525
  %v562 = vpack.c.b16 %v528, %v526
  %v563 = vpack.c.b16 %v531, %v529
  %v564 = vpack.c.b16 %v532, %v530
  %597 = vmatprep.subr.bf16.mxu0 0
  %598 = vmatpush1.bf16.msra.mxu0 %v421
  %599 = vmatprep.subr.bf16.mxu0 0
  %600 = vmatpush1.bf16.msra.mxu0 %v422
  %601 = vmatprep.subr.bf16.mxu0 0
  %602 = vmatpush1.bf16.msra.mxu0 %v423
  %603 = vmatprep.subr.bf16.mxu0 0
  %604 = vmatpush1.bf16.msra.mxu0 %v424
  %605 = vmatprep.subr.bf16.mxu0 0
  %606 = vmatpush1.bf16.msra.mxu0 %v425
  %607 = vmatprep.subr.bf16.mxu0 0
  %608 = vmatpush1.bf16.msra.mxu0 %v426
  %609 = vmatprep.subr.bf16.mxu0 0
  %610 = vmatpush1.bf16.msra.mxu0 %v427
  %611 = vmatprep.subr.bf16.mxu0 0
  %612 = vmatpush1.bf16.msra.mxu0 %v428
  %613 = vmatprep.subr.bf16.mxu0 0
  %614 = vmatpush1.bf16.msra.mxu0 %v429
  %615 = vmatprep.subr.bf16.mxu0 0
  %616 = vmatpush1.bf16.msra.mxu0 %v430
  %617 = vmatprep.subr.bf16.mxu0 0
  %618 = vmatpush1.bf16.msra.mxu0 %v431
  %619 = vmatprep.subr.bf16.mxu0 0
  %620 = vmatpush1.bf16.msra.mxu0 %v432
  %621 = vmatprep.subr.bf16.mxu0 0
  %622 = vmatpush1.bf16.msra.mxu0 %v433
  %623 = vmatprep.subr.bf16.mxu0 0
  %624 = vmatpush1.bf16.msra.mxu0 %v434
  %625 = vmatprep.subr.bf16.mxu0 0
  %626 = vmatpush1.bf16.msra.mxu0 %v435
  %627 = vmatprep.subr.bf16.mxu0 0
  %628 = vmatpush1.bf16.msra.mxu0 %v436
  %629 = vmatprep.mubr.bf16.mxu0 %v534
  %630 = vmatmul.mubr.bf16.gmra.mrb[0].mxu0 %v533
  %v631 = vpop.f32.mrb[0].mxu0
  %v632 = vadd.f32 0.0, %v631
  %v633 = vpop.f32.mrb[0].mxu0
  %v634 = vpop.f32.mrb[0].mxu0
  %v635 = vadd.f32 0.0, %v634
  %v636 = vpop.f32.mrb[0].mxu0
  %637 = vmatprep.mubr.bf16.mxu0 %v536
  %638 = vmatmul.mubr.bf16.gmra.mrb[0].mxu0 %v535
  %v639 = vpop.f32.mrb[0].mxu0
  %v640 = vadd.f32 0.0, %v639
  %v641 = vpop.f32.mrb[0].mxu0
  %v642 = vpop.f32.mrb[0].mxu0
  %v643 = vadd.f32 0.0, %v642
  %v644 = vpop.f32.mrb[0].mxu0
  %645 = vmatprep.mubr.bf16.mxu0 %v538
  %646 = vmatmul.mubr.bf16.gmra.mrb[0].mxu0 %v537
  %v647 = vpop.f32.mrb[0].mxu0
  %v648 = vadd.f32 0.0, %v647
  %v649 = vpop.f32.mrb[0].mxu0
  %v650 = vpop.f32.mrb[0].mxu0
  %v651 = vadd.f32 0.0, %v650
  %v652 = vpop.f32.mrb[0].mxu0
  %653 = vmatprep.mubr.bf16.mxu0 %v540
  %654 = vmatmul.mubr.bf16.gmra.mrb[0].mxu0 %v539
  %v655 = vpop.f32.mrb[0].mxu0
  %v656 = vadd.f32 0.0, %v655
  %v657 = vpop.f32.mrb[0].mxu0
  %v658 = vpop.f32.mrb[0].mxu0
  %v659 = vadd.f32 0.0, %v658
  %v660 = vpop.f32.mrb[0].mxu0
  %661 = vmatprep.mubr.bf16.mxu0 %v542
  %662 = vmatmul.mubr.bf16.gmra.mrb[0].mxu0 %v541
  %v663 = vpop.f32.mrb[0].mxu0
  %v664 = vadd.f32 0.0, %v663
  %v665 = vpop.f32.mrb[0].mxu0
  %v666 = vpop.f32.mrb[0].mxu0
  %v667 = vadd.f32 0.0, %v666
  %v668 = vpop.f32.mrb[0].mxu0
  %669 = vmatprep.mubr.bf16.mxu0 %v544
  %670 = vmatmul.mubr.bf16.gmra.mrb[0].mxu0 %v543
  %v671 = vpop.f32.mrb[0].mxu0
  %v672 = vadd.f32 0.0, %v671
  %v673 = vpop.f32.mrb[0].mxu0
  %v674 = vpop.f32.mrb[0].mxu0
  %v675 = vadd.f32 0.0, %v674
  %v676 = vpop.f32.mrb[0].mxu0
  %677 = vmatprep.mubr.bf16.mxu0 %v546
  %678 = vmatmul.mubr.bf16.gmra.mrb[0].mxu0 %v545
  %v679 = vpop.f32.mrb[0].mxu0
  %v680 = vadd.f32 0.0, %v679
  %v681 = vpop.f32.mrb[0].mxu0
  %v682 = vpop.f32.mrb[0].mxu0
  %v683 = vadd.f32 0.0, %v682
  %v684 = vpop.f32.mrb[0].mxu0
  %685 = vmatprep.mubr.bf16.mxu0 %v548
  %686 = vmatmul.mubr.bf16.gmra.mrb[0].mxu0 %v547
  %v687 = vpop.f32.mrb[0].mxu0
  %v688 = vadd.f32 0.0, %v687
  %v689 = vpop.f32.mrb[0].mxu0
  %v690 = vpop.f32.mrb[0].mxu0
  %v691 = vadd.f32 0.0, %v690
  %v692 = vpop.f32.mrb[0].mxu0
  %693 = vmatprep.mubr.bf16.mxu0 %v550
  %694 = vmatmul.mubr.bf16.gmra.mrb[0].mxu0 %v549
  %v695 = vpop.f32.mrb[0].mxu0
  %v696 = vadd.f32 0.0, %v695
  %v697 = vpop.f32.mrb[0].mxu0
  %v698 = vpop.f32.mrb[0].mxu0
  %v699 = vadd.f32 0.0, %v698
  %v700 = vpop.f32.mrb[0].mxu0
  %701 = vmatprep.mubr.bf16.mxu0 %v552
  %702 = vmatmul.mubr.bf16.gmra.mrb[0].mxu0 %v551
  %v703 = vpop.f32.mrb[0].mxu0
  %v704 = vadd.f32 0.0, %v703
  %v705 = vpop.f32.mrb[0].mxu0
  %v706 = vpop.f32.mrb[0].mxu0
  %v707 = vadd.f32 0.0, %v706
  %v708 = vpop.f32.mrb[0].mxu0
  %709 = vmatprep.mubr.bf16.mxu0 %v554
  %710 = vmatmul.mubr.bf16.gmra.mrb[0].mxu0 %v553
  %v711 = vpop.f32.mrb[0].mxu0
  %v712 = vadd.f32 0.0, %v711
  %v713 = vpop.f32.mrb[0].mxu0
  %v714 = vpop.f32.mrb[0].mxu0
  %v715 = vadd.f32 0.0, %v714
  %v716 = vpop.f32.mrb[0].mxu0
  %717 = vmatprep.mubr.bf16.mxu0 %v556
  %718 = vmatmul.mubr.bf16.gmra.mrb[0].mxu0 %v555
  %v719 = vpop.f32.mrb[0].mxu0
  %v720 = vadd.f32 0.0, %v719
  %v721 = vpop.f32.mrb[0].mxu0
  %v722 = vpop.f32.mrb[0].mxu0
  %v723 = vadd.f32 0.0, %v722
  %v724 = vpop.f32.mrb[0].mxu0
  %725 = vmatprep.mubr.bf16.mxu0 %v558
  %726 = vmatmul.mubr.bf16.gmra.mrb[0].mxu0 %v557
  %v727 = vpop.f32.mrb[0].mxu0
  %v728 = vadd.f32 0.0, %v727
  %v729 = vpop.f32.mrb[0].mxu0
  %v730 = vpop.f32.mrb[0].mxu0
  %v731 = vadd.f32 0.0, %v730
  %v732 = vpop.f32.mrb[0].mxu0
  %733 = vmatprep.mubr.bf16.mxu0 %v560
  %734 = vmatmul.mubr.bf16.gmra.mrb[0].mxu0 %v559
  %v735 = vpop.f32.mrb[0].mxu0
  %v736 = vadd.f32 0.0, %v735
  %v737 = vpop.f32.mrb[0].mxu0
  %v738 = vpop.f32.mrb[0].mxu0
  %v739 = vadd.f32 0.0, %v738
  %v740 = vpop.f32.mrb[0].mxu0
  %741 = vmatprep.mubr.bf16.mxu0 %v562
  %742 = vmatmul.mubr.bf16.gmra.mrb[0].mxu0 %v561
  %v743 = vpop.f32.mrb[0].mxu0
  %v744 = vadd.f32 0.0, %v743
  %v745 = vpop.f32.mrb[0].mxu0
  %v746 = vpop.f32.mrb[0].mxu0
  %v747 = vadd.f32 0.0, %v746
  %v748 = vpop.f32.mrb[0].mxu0
  %749 = vmatprep.mubr.bf16.mxu0 %v564
  %750 = vmatmul.mubr.bf16.gmra.mrb[0].mxu0 %v563
  %v751 = vpop.f32.mrb[0].mxu0
  %v752 = vadd.f32 0.0, %v751
  %v753 = vpop.f32.mrb[0].mxu0
  %v754 = vpop.f32.mrb[0].mxu0
  %v755 = vadd.f32 0.0, %v754
  %v756 = vpop.f32.mrb[0].mxu0
  %757 = vdwg.mxu0
  %vm758 = vcmp.gt.f32.partialorder %v632, 0.0
  %vm759 = vcmp.gt.f32.partialorder %v635, 0.0
  %vm760 = vcmp.gt.f32.partialorder %v640, 0.0
  %vm761 = vcmp.gt.f32.partialorder %v643, 0.0
  %vm762 = vcmp.gt.f32.partialorder %v648, 0.0
  %vm763 = vcmp.gt.f32.partialorder %v651, 0.0
  %vm764 = vcmp.gt.f32.partialorder %v656, 0.0
  %vm765 = vcmp.gt.f32.partialorder %v659, 0.0
  %vm766 = vcmp.gt.f32.partialorder %v664, 0.0
  %vm767 = vcmp.gt.f32.partialorder %v667, 0.0
  %vm768 = vcmp.gt.f32.partialorder %v672, 0.0
  %vm769 = vcmp.gt.f32.partialorder %v675, 0.0
  %vm770 = vcmp.gt.f32.partialorder %v680, 0.0
  %vm771 = vcmp.gt.f32.partialorder %v683, 0.0
  %vm772 = vcmp.gt.f32.partialorder %v688, 0.0
  %vm773 = vcmp.gt.f32.partialorder %v691, 0.0
  %vm774 = vcmp.gt.f32.partialorder %v696, 0.0
  %vm775 = vcmp.gt.f32.partialorder %v699, 0.0
  %vm776 = vcmp.gt.f32.partialorder %v704, 0.0
  %vm777 = vcmp.gt.f32.partialorder %v707, 0.0
  %vm778 = vcmp.gt.f32.partialorder %v712, 0.0
  %vm779 = vcmp.gt.f32.partialorder %v715, 0.0
  %vm780 = vcmp.gt.f32.partialorder %v720, 0.0
  %vm781 = vcmp.gt.f32.partialorder %v723, 0.0
  %vm782 = vcmp.gt.f32.partialorder %v728, 0.0
  %vm783 = vcmp.gt.f32.partialorder %v731, 0.0
  %vm784 = vcmp.gt.f32.partialorder %v736, 0.0
  %vm785 = vcmp.gt.f32.partialorder %v739, 0.0
  %vm786 = vcmp.gt.f32.partialorder %v744, 0.0
  %vm787 = vcmp.gt.f32.partialorder %v747, 0.0
  %vm788 = vcmp.gt.f32.partialorder %v752, 0.0
  %vm789 = vcmp.gt.f32.partialorder %v755, 0.0
  %v790 = vmin.f32 %v632, 0.0
  %v791 = vmin.f32 %v635, 0.0
  %v792 = vmin.f32 %v640, 0.0
  %v793 = vmin.f32 %v643, 0.0
  %v794 = vmin.f32 %v648, 0.0
  %v795 = vmin.f32 %v651, 0.0
  %v796 = vmin.f32 %v656, 0.0
  %v797 = vmin.f32 %v659, 0.0
  %v798 = vmin.f32 %v664, 0.0
  %v799 = vmin.f32 %v667, 0.0
  %v800 = vmin.f32 %v672, 0.0
  %v801 = vmin.f32 %v675, 0.0
  %v802 = vmin.f32 %v680, 0.0
  %v803 = vmin.f32 %v683, 0.0
  %v804 = vmin.f32 %v688, 0.0
  %v805 = vmin.f32 %v691, 0.0
  %v806 = vmin.f32 %v696, 0.0
  %v807 = vmin.f32 %v699, 0.0
  %v808 = vmin.f32 %v704, 0.0
  %v809 = vmin.f32 %v707, 0.0
  %v810 = vmin.f32 %v712, 0.0
  %v811 = vmin.f32 %v715, 0.0
  %v812 = vmin.f32 %v720, 0.0
  %v813 = vmin.f32 %v723, 0.0
  %v814 = vmin.f32 %v728, 0.0
  %v815 = vmin.f32 %v731, 0.0
  %v816 = vmin.f32 %v736, 0.0
  %v817 = vmin.f32 %v739, 0.0
  %v818 = vmin.f32 %v744, 0.0
  %v819 = vmin.f32 %v747, 0.0
  %v820 = vmin.f32 %v752, 0.0
  %v821 = vmin.f32 %v755, 0.0
  %v822 = vmul.f32 %v790, 1.442695
  %v823 = vpow.pop %v822
  %v824 = vmul.f32 %v791, 1.442695
  %v825 = vpow.pop %v824
  %v826 = vmul.f32 %v792, 1.442695
  %v827 = vpow.pop %v826
  %v828 = vmul.f32 %v793, 1.442695
  %v829 = vpow.pop %v828
  %v830 = vmul.f32 %v794, 1.442695
  %v831 = vpow.pop %v830
  %v832 = vmul.f32 %v795, 1.442695
  %v833 = vpow.pop %v832
  %v834 = vmul.f32 %v796, 1.442695
  %v835 = vpow.pop %v834
  %v836 = vmul.f32 %v797, 1.442695
  %v837 = vpow.pop %v836
  %v838 = vmul.f32 %v798, 1.442695
  %v839 = vpow.pop %v838
  %v840 = vmul.f32 %v799, 1.442695
  %v841 = vpow.pop %v840
  %v842 = vmul.f32 %v800, 1.442695
  %v843 = vpow.pop %v842
  %v844 = vmul.f32 %v801, 1.442695
  %v845 = vpow.pop %v844
  %v846 = vmul.f32 %v802, 1.442695
  %v847 = vpow.pop %v846
  %v848 = vmul.f32 %v803, 1.442695
  %v849 = vpow.pop %v848
  %v850 = vmul.f32 %v804, 1.442695
  %v851 = vpow.pop %v850
  %v852 = vmul.f32 %v805, 1.442695
  %v853 = vpow.pop %v852
  %v854 = vmul.f32 %v806, 1.442695
  %v855 = vpow.pop %v854
  %v856 = vmul.f32 %v807, 1.442695
  %v857 = vpow.pop %v856
  %v858 = vmul.f32 %v808, 1.442695
  %v859 = vpow.pop %v858
  %v860 = vmul.f32 %v809, 1.442695
  %v861 = vpow.pop %v860
  %v862 = vmul.f32 %v810, 1.442695
  %v863 = vpow.pop %v862
  %v864 = vmul.f32 %v811, 1.442695
  %v865 = vpow.pop %v864
  %v866 = vmul.f32 %v812, 1.442695
  %v867 = vpow.pop %v866
  %v868 = vmul.f32 %v813, 1.442695
  %v869 = vpow.pop %v868
  %v870 = vmul.f32 %v814, 1.442695
  %v871 = vpow.pop %v870
  %v872 = vmul.f32 %v815, 1.442695
  %v873 = vpow.pop %v872
  %v874 = vmul.f32 %v816, 1.442695
  %v875 = vpow.pop %v874
  %v876 = vmul.f32 %v817, 1.442695
  %v877 = vpow.pop %v876
  %v878 = vmul.f32 %v818, 1.442695
  %v879 = vpow.pop %v878
  %v880 = vmul.f32 %v819, 1.442695
  %v881 = vpow.pop %v880
  %v882 = vmul.f32 %v820, 1.442695
  %v883 = vpow.pop %v882
  %v884 = vmul.f32 %v821, 1.442695
  %v885 = vpow.pop %v884
  %v886 = vsub.f32 %v823, 1.0
  %v887 = vsub.f32 %v825, 1.0
  %v888 = vsub.f32 %v827, 1.0
  %v889 = vsub.f32 %v829, 1.0
  %v890 = vsub.f32 %v831, 1.0
  %v891 = vsub.f32 %v833, 1.0
  %v892 = vsub.f32 %v835, 1.0
  %v893 = vsub.f32 %v837, 1.0
  %v894 = vsub.f32 %v839, 1.0
  %v895 = vsub.f32 %v841, 1.0
  %v896 = vsub.f32 %v843, 1.0
  %v897 = vsub.f32 %v845, 1.0
  %v898 = vsub.f32 %v847, 1.0
  %v899 = vsub.f32 %v849, 1.0
  %v900 = vsub.f32 %v851, 1.0
  %v901 = vsub.f32 %v853, 1.0
  %v902 = vsub.f32 %v855, 1.0
  %v903 = vsub.f32 %v857, 1.0
  %v904 = vsub.f32 %v859, 1.0
  %v905 = vsub.f32 %v861, 1.0
  %v906 = vsub.f32 %v863, 1.0
  %v907 = vsub.f32 %v865, 1.0
  %v908 = vsub.f32 %v867, 1.0
  %v909 = vsub.f32 %v869, 1.0
  %v910 = vsub.f32 %v871, 1.0
  %v911 = vsub.f32 %v873, 1.0
  %v912 = vsub.f32 %v875, 1.0
  %v913 = vsub.f32 %v877, 1.0
  %v914 = vsub.f32 %v879, 1.0
  %v915 = vsub.f32 %v881, 1.0
  %v916 = vsub.f32 %v883, 1.0
  %v917 = vsub.f32 %v885, 1.0
  %v918 = vmul.f32 %v886, 1.6732632
  %v919 = vmul.f32 %v887, 1.6732632
  %v920 = vmul.f32 %v888, 1.6732632
  %v921 = vmul.f32 %v889, 1.6732632
  %v922 = vmul.f32 %v890, 1.6732632
  %v923 = vmul.f32 %v891, 1.6732632
  %v924 = vmul.f32 %v892, 1.6732632
  %v925 = vmul.f32 %v893, 1.6732632
  %v926 = vmul.f32 %v894, 1.6732632
  %v927 = vmul.f32 %v895, 1.6732632
  %v928 = vmul.f32 %v896, 1.6732632
  %v929 = vmul.f32 %v897, 1.6732632
  %v930 = vmul.f32 %v898, 1.6732632
  %v931 = vmul.f32 %v899, 1.6732632
  %v932 = vmul.f32 %v900, 1.6732632
  %v933 = vmul.f32 %v901, 1.6732632
  %v934 = vmul.f32 %v902, 1.6732632
  %v935 = vmul.f32 %v903, 1.6732632
  %v936 = vmul.f32 %v904, 1.6732632
  %v937 = vmul.f32 %v905, 1.6732632
  %v938 = vmul.f32 %v906, 1.6732632
  %v939 = vmul.f32 %v907, 1.6732632
  %v940 = vmul.f32 %v908, 1.6732632
  %v941 = vmul.f32 %v909, 1.6732632
  %v942 = vmul.f32 %v910, 1.6732632
  %v943 = vmul.f32 %v911, 1.6732632
  %v944 = vmul.f32 %v912, 1.6732632
  %v945 = vmul.f32 %v913, 1.6732632
  %v946 = vmul.f32 %v914, 1.6732632
  %v947 = vmul.f32 %v915, 1.6732632
  %v948 = vmul.f32 %v916, 1.6732632
  %v949 = vmul.f32 %v917, 1.6732632
  %v950 = vsel %vm758, %v632, %v918
  %v951 = vsel %vm759, %v635, %v919
  %v952 = vsel %vm760, %v640, %v920
  %v953 = vsel %vm761, %v643, %v921
  %v954 = vsel %vm762, %v648, %v922
  %v955 = vsel %vm763, %v651, %v923
  %v956 = vsel %vm764, %v656, %v924
  %v957 = vsel %vm765, %v659, %v925
  %v958 = vsel %vm766, %v664, %v926
  %v959 = vsel %vm767, %v667, %v927
  %v960 = vsel %vm768, %v672, %v928
  %v961 = vsel %vm769, %v675, %v929
  %v962 = vsel %vm770, %v680, %v930
  %v963 = vsel %vm771, %v683, %v931
  %v964 = vsel %vm772, %v688, %v932
  %v965 = vsel %vm773, %v691, %v933
  %v966 = vsel %vm774, %v696, %v934
  %v967 = vsel %vm775, %v699, %v935
  %v968 = vsel %vm776, %v704, %v936
  %v969 = vsel %vm777, %v707, %v937
  %v970 = vsel %vm778, %v712, %v938
  %v971 = vsel %vm779, %v715, %v939
  %v972 = vsel %vm780, %v720, %v940
  %v973 = vsel %vm781, %v723, %v941
  %v974 = vsel %vm782, %v728, %v942
  %v975 = vsel %vm783, %v731, %v943
  %v976 = vsel %vm784, %v736, %v944
  %v977 = vsel %vm785, %v739, %v945
  %v978 = vsel %vm786, %v744, %v946
  %v979 = vsel %vm787, %v747, %v947
  %v980 = vsel %vm788, %v752, %v948
  %v981 = vsel %vm789, %v755, %v949
  %v982 = vmul.f32 %v950, 1.050701
  %v983 = vmul.f32 %v951, 1.050701
  %v984 = vmul.f32 %v952, 1.050701
  %v985 = vmul.f32 %v953, 1.050701
  %v986 = vmul.f32 %v954, 1.050701
  %v987 = vmul.f32 %v955, 1.050701
  %v988 = vmul.f32 %v956, 1.050701
  %v989 = vmul.f32 %v957, 1.050701
  %v990 = vmul.f32 %v958, 1.050701
  %v991 = vmul.f32 %v959, 1.050701
  %v992 = vmul.f32 %v960, 1.050701
  %v993 = vmul.f32 %v961, 1.050701
  %v994 = vmul.f32 %v962, 1.050701
  %v995 = vmul.f32 %v963, 1.050701
  %v996 = vmul.f32 %v964, 1.050701
  %v997 = vmul.f32 %v965, 1.050701
  %v998 = vmul.f32 %v966, 1.050701
  %v999 = vmul.f32 %v967, 1.050701
  %v1000 = vmul.f32 %v968, 1.050701
  %v1001 = vmul.f32 %v969, 1.050701
  %v1002 = vmul.f32 %v970, 1.050701
  %v1003 = vmul.f32 %v971, 1.050701
  %v1004 = vmul.f32 %v972, 1.050701
  %v1005 = vmul.f32 %v973, 1.050701
  %v1006 = vmul.f32 %v974, 1.050701
  %v1007 = vmul.f32 %v975, 1.050701
  %v1008 = vmul.f32 %v976, 1.050701
  %v1009 = vmul.f32 %v977, 1.050701
  %v1010 = vmul.f32 %v978, 1.050701
  %v1011 = vmul.f32 %v979, 1.050701
  %v1012 = vmul.f32 %v980, 1.050701
  %v1013 = vmul.f32 %v981, 1.050701
  %v1014 = vld [vmem:[%s3] sm:$0x1]
  %v1016 = vlaneseq
  %v1017 = vshrl.u32 %v1016, 7
  %v1018 = vsub.s32 0, %v1017
  %v1019 = vrot.slane %v1014, %v1018
  %v1021 = vadd.f32 %v982, %v1019
  %v1022 = vadd.f32 %v983, %v1019
  %v1023 = vadd.f32 %v984, %v1019
  %v1024 = vadd.f32 %v985, %v1019
  %v1025 = vadd.f32 %v986, %v1019
  %v1026 = vadd.f32 %v987, %v1019
  %v1027 = vadd.f32 %v988, %v1019
  %v1028 = vadd.f32 %v989, %v1019
  %v1029 = vadd.f32 %v990, %v1019
  %v1030 = vadd.f32 %v991, %v1019
  %v1031 = vadd.f32 %v992, %v1019
  %v1032 = vadd.f32 %v993, %v1019
  %v1033 = vadd.f32 %v994, %v1019
  %v1034 = vadd.f32 %v995, %v1019
  %v1035 = vadd.f32 %v996, %v1019
  %v1036 = vadd.f32 %v997, %v1019
  %v1037 = vadd.f32 %v998, %v1019
  %v1038 = vadd.f32 %v999, %v1019
  %v1039 = vadd.f32 %v1000, %v1019
  %v1040 = vadd.f32 %v1001, %v1019
  %v1041 = vadd.f32 %v1002, %v1019
  %v1042 = vadd.f32 %v1003, %v1019
  %v1043 = vadd.f32 %v1004, %v1019
  %v1044 = vadd.f32 %v1005, %v1019
  %v1045 = vadd.f32 %v1006, %v1019
  %v1046 = vadd.f32 %v1007, %v1019
  %v1047 = vadd.f32 %v1008, %v1019
  %v1048 = vadd.f32 %v1009, %v1019
  %v1049 = vadd.f32 %v1010, %v1019
  %v1050 = vadd.f32 %v1011, %v1019
  %v1051 = vadd.f32 %v1012, %v1019
  %v1052 = vadd.f32 %v1013, %v1019
  %v1053 = vpack.c.bf16 %v1022, %v1021
  %v1054 = vpack.c.bf16 %v1024, %v1023
  %v1055 = vpack.c.bf16 %v1026, %v1025
  %v1056 = vpack.c.bf16 %v1028, %v1027
  %v1057 = vpack.c.bf16 %v1030, %v1029
  %v1058 = vpack.c.bf16 %v1032, %v1031
  %v1059 = vpack.c.bf16 %v1034, %v1033
  %v1060 = vpack.c.bf16 %v1036, %v1035
  %v1061 = vpack.c.bf16 %v1038, %v1037
  %v1062 = vpack.c.bf16 %v1040, %v1039
  %v1063 = vpack.c.bf16 %v1042, %v1041
  %v1064 = vpack.c.bf16 %v1044, %v1043
  %v1065 = vpack.c.bf16 %v1046, %v1045
  %v1066 = vpack.c.bf16 %v1048, %v1047
  %v1067 = vpack.c.bf16 %v1050, %v1049
  %v1068 = vpack.c.bf16 %v1052, %v1051
  %v1069 = vld [vmem:[%s4] sm:$0xf]
  %v1070 = vld [vmem:[%s4 + $0x4] sm:$0xf]
  %v1071 = vld [vmem:[%s4 + $0x8] sm:$0xf]
  %v1072 = vld [vmem:[%s4 + $0xc] sm:$0xf]
  %v1073 = vld [vmem:[%s4 + $0x10] sm:$0xf]
  %v1074 = vld [vmem:[%s4 + $0x14] sm:$0xf]
  %v1075 = vld [vmem:[%s4 + $0x18] sm:$0xf]
  %v1076 = vld [vmem:[%s4 + $0x1c] sm:$0xf]
  %v1077 = vld [vmem:[%s4 + $0x20] sm:$0xf]
  %v1078 = vld [vmem:[%s4 + $0x24] sm:$0xf]
  %v1079 = vld [vmem:[%s4 + $0x28] sm:$0xf]
  %v1080 = vld [vmem:[%s4 + $0x2c] sm:$0xf]
  %v1081 = vld [vmem:[%s4 + $0x30] sm:$0xf]
  %v1082 = vld [vmem:[%s4 + $0x34] sm:$0xf]
  %v1083 = vld [vmem:[%s4 + $0x38] sm:$0xf]
  %v1084 = vld [vmem:[%s4 + $0x3c] sm:$0xf]
  %v1101 = vunpack.c.l.b16 %v1069
  %v1102 = vunpack.c.l.b16 %v1070
  %v1103 = vunpack.c.l.b16 %v1071
  %v1104 = vunpack.c.l.b16 %v1072
  %v1105 = vunpack.c.l.b16 %v1073
  %v1106 = vunpack.c.l.b16 %v1074
  %v1107 = vunpack.c.l.b16 %v1075
  %v1108 = vunpack.c.l.b16 %v1076
  %v1109 = vunpack.c.l.b16 %v1077
  %v1110 = vunpack.c.l.b16 %v1078
  %v1111 = vunpack.c.l.b16 %v1079
  %v1112 = vunpack.c.l.b16 %v1080
  %v1113 = vunpack.c.l.b16 %v1081
  %v1114 = vunpack.c.l.b16 %v1082
  %v1115 = vunpack.c.l.b16 %v1083
  %v1116 = vunpack.c.l.b16 %v1084
  %v1117 = vpack.c.b16 %v1102, %v1101
  %v1118 = vpack.c.b16 %v1104, %v1103
  %v1119 = vpack.c.b16 %v1106, %v1105
  %v1120 = vpack.c.b16 %v1108, %v1107
  %v1121 = vpack.c.b16 %v1110, %v1109
  %v1122 = vpack.c.b16 %v1112, %v1111
  %v1123 = vpack.c.b16 %v1114, %v1113
  %v1124 = vpack.c.b16 %v1116, %v1115
  %1133 = vmatprep.subr.bf16.mxu0 0
  %1134 = vmatpush1.bf16.msra.mxu0 %v1117
  %1135 = vmatprep.subr.bf16.mxu0 0
  %1136 = vmatpush1.bf16.msra.mxu0 %v1118
  %1137 = vmatprep.subr.bf16.mxu0 0
  %1138 = vmatpush1.bf16.msra.mxu0 %v1119
  %1139 = vmatprep.subr.bf16.mxu0 0
  %1140 = vmatpush1.bf16.msra.mxu0 %v1120
  %1141 = vmatprep.subr.bf16.mxu0 0
  %1142 = vmatpush1.bf16.msra.mxu0 %v1121
  %1143 = vmatprep.subr.bf16.mxu0 0
  %1144 = vmatpush1.bf16.msra.mxu0 %v1122
  %1145 = vmatprep.subr.bf16.mxu0 0
  %1146 = vmatpush1.bf16.msra.mxu0 %v1123
  %1147 = vmatprep.subr.bf16.mxu0 0
  %1148 = vmatpush1.bf16.msra.mxu0 %v1124
  %1149 = vmatprep.subr.bf16.mxu0 0
  %1150 = vmatpush1.bf16.msra.mxu0 0
  %1151 = vmatprep.subr.bf16.mxu0 0
  %1152 = vmatpush1.bf16.msra.mxu0 0
  %1153 = vmatprep.subr.bf16.mxu0 0
  %1154 = vmatpush1.bf16.msra.mxu0 0
  %1155 = vmatprep.subr.bf16.mxu0 0
  %1156 = vmatpush1.bf16.msra.mxu0 0
  %1157 = vmatprep.subr.bf16.mxu0 0
  %1158 = vmatpush1.bf16.msra.mxu0 0
  %1159 = vmatprep.subr.bf16.mxu0 0
  %1160 = vmatpush1.bf16.msra.mxu0 0
  %1161 = vmatprep.subr.bf16.mxu0 0
  %1162 = vmatpush1.bf16.msra.mxu0 0
  %1163 = vmatprep.subr.bf16.mxu0 0
  %1164 = vmatpush1.bf16.msra.mxu0 0
  %1165 = vmatprep.mubr.bf16.mxu0 0
  %1166 = vmatmul.mubr.bf16.gmra.mrb[0].mxu0 %v1053
  %v1167 = vpop.f32.mrb[0].mxu0
  %v1168 = vadd.f32 0.0, %v1167
  %v1169 = vpop.f32.mrb[0].mxu0
  %v1170 = vpop.f32.mrb[0].mxu0
  %v1171 = vadd.f32 0.0, %v1170
  %v1172 = vpop.f32.mrb[0].mxu0
  %1173 = vmatprep.mubr.bf16.mxu0 0
  %1174 = vmatmul.mubr.bf16.gmra.mrb[0].mxu0 %v1054
  %v1175 = vpop.f32.mrb[0].mxu0
  %v1176 = vadd.f32 0.0, %v1175
  %v1177 = vpop.f32.mrb[0].mxu0
  %v1178 = vpop.f32.mrb[0].mxu0
  %v1179 = vadd.f32 0.0, %v1178
  %v1180 = vpop.f32.mrb[0].mxu0
  %1181 = vmatprep.mubr.bf16.mxu0 0
  %1182 = vmatmul.mubr.bf16.gmra.mrb[0].mxu0 %v1055
  %v1183 = vpop.f32.mrb[0].mxu0
  %v1184 = vadd.f32 0.0, %v1183
  %v1185 = vpop.f32.mrb[0].mxu0
  %v1186 = vpop.f32.mrb[0].mxu0
  %v1187 = vadd.f32 0.0, %v1186
  %v1188 = vpop.f32.mrb[0].mxu0
  %1189 = vmatprep.mubr.bf16.mxu0 0
  %1190 = vmatmul.mubr.bf16.gmra.mrb[0].mxu0 %v1056
  %v1191 = vpop.f32.mrb[0].mxu0
  %v1192 = vadd.f32 0.0, %v1191
  %v1193 = vpop.f32.mrb[0].mxu0
  %v1194 = vpop.f32.mrb[0].mxu0
  %v1195 = vadd.f32 0.0, %v1194
  %v1196 = vpop.f32.mrb[0].mxu0
  %1197 = vmatprep.mubr.bf16.mxu0 0
  %1198 = vmatmul.mubr.bf16.gmra.mrb[0].mxu0 %v1057
  %v1199 = vpop.f32.mrb[0].mxu0
  %v1200 = vadd.f32 0.0, %v1199
  %v1201 = vpop.f32.mrb[0].mxu0
  %v1202 = vpop.f32.mrb[0].mxu0
  %v1203 = vadd.f32 0.0, %v1202
  %v1204 = vpop.f32.mrb[0].mxu0
  %1205 = vmatprep.mubr.bf16.mxu0 0
  %1206 = vmatmul.mubr.bf16.gmra.mrb[0].mxu0 %v1058
  %v1207 = vpop.f32.mrb[0].mxu0
  %v1208 = vadd.f32 0.0, %v1207
  %v1209 = vpop.f32.mrb[0].mxu0
  %v1210 = vpop.f32.mrb[0].mxu0
  %v1211 = vadd.f32 0.0, %v1210
  %v1212 = vpop.f32.mrb[0].mxu0
  %1213 = vmatprep.mubr.bf16.mxu0 0
  %1214 = vmatmul.mubr.bf16.gmra.mrb[0].mxu0 %v1059
  %v1215 = vpop.f32.mrb[0].mxu0
  %v1216 = vadd.f32 0.0, %v1215
  %v1217 = vpop.f32.mrb[0].mxu0
  %v1218 = vpop.f32.mrb[0].mxu0
  %v1219 = vadd.f32 0.0, %v1218
  %v1220 = vpop.f32.mrb[0].mxu0
  %1221 = vmatprep.mubr.bf16.mxu0 0
  %1222 = vmatmul.mubr.bf16.gmra.mrb[0].mxu0 %v1060
  %v1223 = vpop.f32.mrb[0].mxu0
  %v1224 = vadd.f32 0.0, %v1223
  %v1225 = vpop.f32.mrb[0].mxu0
  %v1226 = vpop.f32.mrb[0].mxu0
  %v1227 = vadd.f32 0.0, %v1226
  %v1228 = vpop.f32.mrb[0].mxu0
  %1229 = vmatprep.mubr.bf16.mxu0 0
  %1230 = vmatmul.mubr.bf16.gmra.mrb[0].mxu0 %v1061
  %v1231 = vpop.f32.mrb[0].mxu0
  %v1232 = vadd.f32 0.0, %v1231
  %v1233 = vpop.f32.mrb[0].mxu0
  %v1234 = vpop.f32.mrb[0].mxu0
  %v1235 = vadd.f32 0.0, %v1234
  %v1236 = vpop.f32.mrb[0].mxu0
  %1237 = vmatprep.mubr.bf16.mxu0 0
  %1238 = vmatmul.mubr.bf16.gmra.mrb[0].mxu0 %v1062
  %v1239 = vpop.f32.mrb[0].mxu0
  %v1240 = vadd.f32 0.0, %v1239
  %v1241 = vpop.f32.mrb[0].mxu0
  %v1242 = vpop.f32.mrb[0].mxu0
  %v1243 = vadd.f32 0.0, %v1242
  %v1244 = vpop.f32.mrb[0].mxu0
  %1245 = vmatprep.mubr.bf16.mxu0 0
  %1246 = vmatmul.mubr.bf16.gmra.mrb[0].mxu0 %v1063
  %v1247 = vpop.f32.mrb[0].mxu0
  %v1248 = vadd.f32 0.0, %v1247
  %v1249 = vpop.f32.mrb[0].mxu0
  %v1250 = vpop.f32.mrb[0].mxu0
  %v1251 = vadd.f32 0.0, %v1250
  %v1252 = vpop.f32.mrb[0].mxu0
  %1253 = vmatprep.mubr.bf16.mxu0 0
  %1254 = vmatmul.mubr.bf16.gmra.mrb[0].mxu0 %v1064
  %v1255 = vpop.f32.mrb[0].mxu0
  %v1256 = vadd.f32 0.0, %v1255
  %v1257 = vpop.f32.mrb[0].mxu0
  %v1258 = vpop.f32.mrb[0].mxu0
  %v1259 = vadd.f32 0.0, %v1258
  %v1260 = vpop.f32.mrb[0].mxu0
  %1261 = vmatprep.mubr.bf16.mxu0 0
  %1262 = vmatmul.mubr.bf16.gmra.mrb[0].mxu0 %v1065
  %v1263 = vpop.f32.mrb[0].mxu0
  %v1264 = vadd.f32 0.0, %v1263
  %v1265 = vpop.f32.mrb[0].mxu0
  %v1266 = vpop.f32.mrb[0].mxu0
  %v1267 = vadd.f32 0.0, %v1266
  %v1268 = vpop.f32.mrb[0].mxu0
  %1269 = vmatprep.mubr.bf16.mxu0 0
  %1270 = vmatmul.mubr.bf16.gmra.mrb[0].mxu0 %v1066
  %v1271 = vpop.f32.mrb[0].mxu0
  %v1272 = vadd.f32 0.0, %v1271
  %v1273 = vpop.f32.mrb[0].mxu0
  %v1274 = vpop.f32.mrb[0].mxu0
  %v1275 = vadd.f32 0.0, %v1274
  %v1276 = vpop.f32.mrb[0].mxu0
  %1277 = vmatprep.mubr.bf16.mxu0 0
  %1278 = vmatmul.mubr.bf16.gmra.mrb[0].mxu0 %v1067
  %v1279 = vpop.f32.mrb[0].mxu0
  %v1280 = vadd.f32 0.0, %v1279
  %v1281 = vpop.f32.mrb[0].mxu0
  %v1282 = vpop.f32.mrb[0].mxu0
  %v1283 = vadd.f32 0.0, %v1282
  %v1284 = vpop.f32.mrb[0].mxu0
  %1285 = vmatprep.mubr.bf16.mxu0 0
  %1286 = vmatmul.mubr.bf16.gmra.mrb[0].mxu0 %v1068
  %v1287 = vpop.f32.mrb[0].mxu0
  %v1288 = vadd.f32 0.0, %v1287
  %v1289 = vpop.f32.mrb[0].mxu0
  %v1290 = vpop.f32.mrb[0].mxu0
  %v1291 = vadd.f32 0.0, %v1290
  %v1292 = vpop.f32.mrb[0].mxu0
  %1293 = vdwg.mxu0
  %v1294 = vpack.c.bf16 %v1171, %v1168
  %v1295 = vpack.c.bf16 %v1179, %v1176
  %v1296 = vpack.c.bf16 %v1187, %v1184
  %v1297 = vpack.c.bf16 %v1195, %v1192
  %v1298 = vpack.c.bf16 %v1203, %v1200
  %v1299 = vpack.c.bf16 %v1211, %v1208
  %v1300 = vpack.c.bf16 %v1219, %v1216
  %v1301 = vpack.c.bf16 %v1227, %v1224
  %v1302 = vpack.c.bf16 %v1235, %v1232
  %v1303 = vpack.c.bf16 %v1243, %v1240
  %v1304 = vpack.c.bf16 %v1251, %v1248
  %v1305 = vpack.c.bf16 %v1259, %v1256
  %v1306 = vpack.c.bf16 %v1267, %v1264
  %v1307 = vpack.c.bf16 %v1275, %v1272
  %v1308 = vpack.c.bf16 %v1283, %v1280
  %v1309 = vpack.c.bf16 %v1291, %v1288
  %1310 = vmatprep.subr.bf16.mxu0 0
  %1311 = vmatpush1.bf16.msra.mxu0 %v1294
  %1312 = vmatprep.subr.bf16.mxu0 0
  %1313 = vmatpush1.bf16.msra.mxu0 %v1295
  %1314 = vmatprep.subr.bf16.mxu0 0
  %1315 = vmatpush1.bf16.msra.mxu0 %v1296
  %1316 = vmatprep.subr.bf16.mxu0 0
  %1317 = vmatpush1.bf16.msra.mxu0 %v1297
  %1318 = vmatprep.subr.bf16.mxu0 0
  %1319 = vmatpush1.bf16.msra.mxu0 %v1298
  %1320 = vmatprep.subr.bf16.mxu0 0
  %1321 = vmatpush1.bf16.msra.mxu0 %v1299
  %1322 = vmatprep.subr.bf16.mxu0 0
  %1323 = vmatpush1.bf16.msra.mxu0 %v1300
  %1324 = vmatprep.subr.bf16.mxu0 0
  %1325 = vmatpush1.bf16.msra.mxu0 %v1301
  %1326 = vmatprep.subr.bf16.mxu0 0
  %1327 = vmatpush1.bf16.msra.mxu0 %v1302
  %1328 = vmatprep.subr.bf16.mxu0 0
  %1329 = vmatpush1.bf16.msra.mxu0 %v1303
  %1330 = vmatprep.subr.bf16.mxu0 0
  %1331 = vmatpush1.bf16.msra.mxu0 %v1304
  %1332 = vmatprep.subr.bf16.mxu0 0
  %1333 = vmatpush1.bf16.msra.mxu0 %v1305
  %1334 = vmatprep.subr.bf16.mxu0 0
  %1335 = vmatpush1.bf16.msra.mxu0 %v1306
  %1336 = vmatprep.subr.bf16.mxu0 0
  %1337 = vmatpush1.bf16.msra.mxu0 %v1307
  %1338 = vmatprep.subr.bf16.mxu0 0
  %1339 = vmatpush1.bf16.msra.mxu0 %v1308
  %1340 = vmatprep.subr.bf16.mxu0 0
  %1341 = vmatpush1.bf16.msra.mxu0 %v1309
  %1342 = vmatprep.mubr.bf16.mxu0 %v534
  %1343 = vmatmul.mubr.bf16.gmra.mrb[0].mxu0 %v533
  %v1344 = vpop.f32.mrb[0].mxu0
  %v1345 = vadd.f32 0.0, %v1344
  %v1346 = vpop.f32.mrb[0].mxu0
  %v1347 = vpop.f32.mrb[0].mxu0
  %v1348 = vadd.f32 0.0, %v1347
  %v1349 = vpop.f32.mrb[0].mxu0
  %1350 = vmatprep.mubr.bf16.mxu0 %v536
  %1351 = vmatmul.mubr.bf16.gmra.mrb[0].mxu0 %v535
  %v1352 = vpop.f32.mrb[0].mxu0
  %v1353 = vadd.f32 0.0, %v1352
  %v1354 = vpop.f32.mrb[0].mxu0
  %v1355 = vpop.f32.mrb[0].mxu0
  %v1356 = vadd.f32 0.0, %v1355
  %v1357 = vpop.f32.mrb[0].mxu0
  %1358 = vmatprep.mubr.bf16.mxu0 %v538
  %1359 = vmatmul.mubr.bf16.gmra.mrb[0].mxu0 %v537
  %v1360 = vpop.f32.mrb[0].mxu0
  %v1361 = vadd.f32 0.0, %v1360
  %v1362 = vpop.f32.mrb[0].mxu0
  %v1363 = vpop.f32.mrb[0].mxu0
  %v1364 = vadd.f32 0.0, %v1363
  %v1365 = vpop.f32.mrb[0].mxu0
  %1366 = vmatprep.mubr.bf16.mxu0 %v540
  %1367 = vmatmul.mubr.bf16.gmra.mrb[0].mxu0 %v539
  %v1368 = vpop.f32.mrb[0].mxu0
  %v1369 = vadd.f32 0.0, %v1368
  %v1370 = vpop.f32.mrb[0].mxu0
  %v1371 = vpop.f32.mrb[0].mxu0
  %v1372 = vadd.f32 0.0, %v1371
  %v1373 = vpop.f32.mrb[0].mxu0
  %1374 = vmatprep.mubr.bf16.mxu0 %v542
  %1375 = vmatmul.mubr.bf16.gmra.mrb[0].mxu0 %v541
  %v1376 = vpop.f32.mrb[0].mxu0
  %v1377 = vadd.f32 0.0, %v1376
  %v1378 = vpop.f32.mrb[0].mxu0
  %v1379 = vpop.f32.mrb[0].mxu0
  %v1380 = vadd.f32 0.0, %v1379
  %v1381 = vpop.f32.mrb[0].mxu0
  %1382 = vmatprep.mubr.bf16.mxu0 %v544
  %1383 = vmatmul.mubr.bf16.gmra.mrb[0].mxu0 %v543
  %v1384 = vpop.f32.mrb[0].mxu0
  %v1385 = vadd.f32 0.0, %v1384
  %v1386 = vpop.f32.mrb[0].mxu0
  %v1387 = vpop.f32.mrb[0].mxu0
  %v1388 = vadd.f32 0.0, %v1387
  %v1389 = vpop.f32.mrb[0].mxu0
  %1390 = vmatprep.mubr.bf16.mxu0 %v546
  %1391 = vmatmul.mubr.bf16.gmra.mrb[0].mxu0 %v545
  %v1392 = vpop.f32.mrb[0].mxu0
  %v1393 = vadd.f32 0.0, %v1392
  %v1394 = vpop.f32.mrb[0].mxu0
  %v1395 = vpop.f32.mrb[0].mxu0
  %v1396 = vadd.f32 0.0, %v1395
  %v1397 = vpop.f32.mrb[0].mxu0
  %1398 = vmatprep.mubr.bf16.mxu0 %v548
  %1399 = vmatmul.mubr.bf16.gmra.mrb[0].mxu0 %v547
  %v1400 = vpop.f32.mrb[0].mxu0
  %v1401 = vadd.f32 0.0, %v1400
  %v1402 = vpop.f32.mrb[0].mxu0
  %v1403 = vpop.f32.mrb[0].mxu0
  %v1404 = vadd.f32 0.0, %v1403
  %v1405 = vpop.f32.mrb[0].mxu0
  %1406 = vmatprep.mubr.bf16.mxu0 %v550
  %1407 = vmatmul.mubr.bf16.gmra.mrb[0].mxu0 %v549
  %v1408 = vpop.f32.mrb[0].mxu0
  %v1409 = vadd.f32 0.0, %v1408
  %v1410 = vpop.f32.mrb[0].mxu0
  %v1411 = vpop.f32.mrb[0].mxu0
  %v1412 = vadd.f32 0.0, %v1411
  %v1413 = vpop.f32.mrb[0].mxu0
  %1414 = vmatprep.mubr.bf16.mxu0 %v552
  %1415 = vmatmul.mubr.bf16.gmra.mrb[0].mxu0 %v551
  %v1416 = vpop.f32.mrb[0].mxu0
  %v1417 = vadd.f32 0.0, %v1416
  %v1418 = vpop.f32.mrb[0].mxu0
  %v1419 = vpop.f32.mrb[0].mxu0
  %v1420 = vadd.f32 0.0, %v1419
  %v1421 = vpop.f32.mrb[0].mxu0
  %1422 = vmatprep.mubr.bf16.mxu0 %v554
  %1423 = vmatmul.mubr.bf16.gmra.mrb[0].mxu0 %v553
  %v1424 = vpop.f32.mrb[0].mxu0
  %v1425 = vadd.f32 0.0, %v1424
  %v1426 = vpop.f32.mrb[0].mxu0
  %v1427 = vpop.f32.mrb[0].mxu0
  %v1428 = vadd.f32 0.0, %v1427
  %v1429 = vpop.f32.mrb[0].mxu0
  %1430 = vmatprep.mubr.bf16.mxu0 %v556
  %1431 = vmatmul.mubr.bf16.gmra.mrb[0].mxu0 %v555
  %v1432 = vpop.f32.mrb[0].mxu0
  %v1433 = vadd.f32 0.0, %v1432
  %v1434 = vpop.f32.mrb[0].mxu0
  %v1435 = vpop.f32.mrb[0].mxu0
  %v1436 = vadd.f32 0.0, %v1435
  %v1437 = vpop.f32.mrb[0].mxu0
  %1438 = vmatprep.mubr.bf16.mxu0 %v558
  %1439 = vmatmul.mubr.bf16.gmra.mrb[0].mxu0 %v557
  %v1440 = vpop.f32.mrb[0].mxu0
  %v1441 = vadd.f32 0.0, %v1440
  %v1442 = vpop.f32.mrb[0].mxu0
  %v1443 = vpop.f32.mrb[0].mxu0
  %v1444 = vadd.f32 0.0, %v1443
  %v1445 = vpop.f32.mrb[0].mxu0
  %1446 = vmatprep.mubr.bf16.mxu0 %v560
  %1447 = vmatmul.mubr.bf16.gmra.mrb[0].mxu0 %v559
  %v1448 = vpop.f32.mrb[0].mxu0
  %v1449 = vadd.f32 0.0, %v1448
  %v1450 = vpop.f32.mrb[0].mxu0
  %v1451 = vpop.f32.mrb[0].mxu0
  %v1452 = vadd.f32 0.0, %v1451
  %v1453 = vpop.f32.mrb[0].mxu0
  %1454 = vmatprep.mubr.bf16.mxu0 %v562
  %1455 = vmatmul.mubr.bf16.gmra.mrb[0].mxu0 %v561
  %v1456 = vpop.f32.mrb[0].mxu0
  %v1457 = vadd.f32 0.0, %v1456
  %v1458 = vpop.f32.mrb[0].mxu0
  %v1459 = vpop.f32.mrb[0].mxu0
  %v1460 = vadd.f32 0.0, %v1459
  %v1461 = vpop.f32.mrb[0].mxu0
  %1462 = vmatprep.mubr.bf16.mxu0 %v564
  %1463 = vmatmul.mubr.bf16.gmra.mrb[0].mxu0 %v563
  %v1464 = vpop.f32.mrb[0].mxu0
  %v1465 = vadd.f32 0.0, %v1464
  %v1466 = vpop.f32.mrb[0].mxu0
  %v1467 = vpop.f32.mrb[0].mxu0
  %v1468 = vadd.f32 0.0, %v1467
  %v1469 = vpop.f32.mrb[0].mxu0
  %1470 = vdwg.mxu0
  %vm1471 = vcmp.gt.f32.partialorder %v1345, 0.0
  %vm1472 = vcmp.gt.f32.partialorder %v1348, 0.0
  %vm1473 = vcmp.gt.f32.partialorder %v1353, 0.0
  %vm1474 = vcmp.gt.f32.partialorder %v1356, 0.0
  %vm1475 = vcmp.gt.f32.partialorder %v1361, 0.0
  %vm1476 = vcmp.gt.f32.partialorder %v1364, 0.0
  %vm1477 = vcmp.gt.f32.partialorder %v1369, 0.0
  %vm1478 = vcmp.gt.f32.partialorder %v1372, 0.0
  %vm1479 = vcmp.gt.f32.partialorder %v1377, 0.0
  %vm1480 = vcmp.gt.f32.partialorder %v1380, 0.0
  %vm1481 = vcmp.gt.f32.partialorder %v1385, 0.0
  %vm1482 = vcmp.gt.f32.partialorder %v1388, 0.0
  %vm1483 = vcmp.gt.f32.partialorder %v1393, 0.0
  %vm1484 = vcmp.gt.f32.partialorder %v1396, 0.0
  %vm1485 = vcmp.gt.f32.partialorder %v1401, 0.0
  %vm1486 = vcmp.gt.f32.partialorder %v1404, 0.0
  %vm1487 = vcmp.gt.f32.partialorder %v1409, 0.0
  %vm1488 = vcmp.gt.f32.partialorder %v1412, 0.0
  %vm1489 = vcmp.gt.f32.partialorder %v1417, 0.0
  %vm1490 = vcmp.gt.f32.partialorder %v1420, 0.0
  %vm1491 = vcmp.gt.f32.partialorder %v1425, 0.0
  %vm1492 = vcmp.gt.f32.partialorder %v1428, 0.0
  %vm1493 = vcmp.gt.f32.partialorder %v1433, 0.0
  %vm1494 = vcmp.gt.f32.partialorder %v1436, 0.0
  %vm1495 = vcmp.gt.f32.partialorder %v1441, 0.0
  %vm1496 = vcmp.gt.f32.partialorder %v1444, 0.0
  %vm1497 = vcmp.gt.f32.partialorder %v1449, 0.0
  %vm1498 = vcmp.gt.f32.partialorder %v1452, 0.0
  %vm1499 = vcmp.gt.f32.partialorder %v1457, 0.0
  %vm1500 = vcmp.gt.f32.partialorder %v1460, 0.0
  %vm1501 = vcmp.gt.f32.partialorder %v1465, 0.0
  %vm1502 = vcmp.gt.f32.partialorder %v1468, 0.0
  %v1503 = vmin.f32 %v1345, 0.0
  %v1504 = vmin.f32 %v1348, 0.0
  %v1505 = vmin.f32 %v1353, 0.0
  %v1506 = vmin.f32 %v1356, 0.0
  %v1507 = vmin.f32 %v1361, 0.0
  %v1508 = vmin.f32 %v1364, 0.0
  %v1509 = vmin.f32 %v1369, 0.0
  %v1510 = vmin.f32 %v1372, 0.0
  %v1511 = vmin.f32 %v1377, 0.0
  %v1512 = vmin.f32 %v1380, 0.0
  %v1513 = vmin.f32 %v1385, 0.0
  %v1514 = vmin.f32 %v1388, 0.0
  %v1515 = vmin.f32 %v1393, 0.0
  %v1516 = vmin.f32 %v1396, 0.0
  %v1517 = vmin.f32 %v1401, 0.0
  %v1518 = vmin.f32 %v1404, 0.0
  %v1519 = vmin.f32 %v1409, 0.0
  %v1520 = vmin.f32 %v1412, 0.0
  %v1521 = vmin.f32 %v1417, 0.0
  %v1522 = vmin.f32 %v1420, 0.0
  %v1523 = vmin.f32 %v1425, 0.0
  %v1524 = vmin.f32 %v1428, 0.0
  %v1525 = vmin.f32 %v1433, 0.0
  %v1526 = vmin.f32 %v1436, 0.0
  %v1527 = vmin.f32 %v1441, 0.0
  %v1528 = vmin.f32 %v1444, 0.0
  %v1529 = vmin.f32 %v1449, 0.0
  %v1530 = vmin.f32 %v1452, 0.0
  %v1531 = vmin.f32 %v1457, 0.0
  %v1532 = vmin.f32 %v1460, 0.0
  %v1533 = vmin.f32 %v1465, 0.0
  %v1534 = vmin.f32 %v1468, 0.0
  %v1535 = vmul.f32 %v1503, 1.442695
  %v1536 = vpow.pop %v1535
  %v1537 = vmul.f32 %v1504, 1.442695
  %v1538 = vpow.pop %v1537
  %v1539 = vmul.f32 %v1505, 1.442695
  %v1540 = vpow.pop %v1539
  %v1541 = vmul.f32 %v1506, 1.442695
  %v1542 = vpow.pop %v1541
  %v1543 = vmul.f32 %v1507, 1.442695
  %v1544 = vpow.pop %v1543
  %v1545 = vmul.f32 %v1508, 1.442695
  %v1546 = vpow.pop %v1545
  %v1547 = vmul.f32 %v1509, 1.442695
  %v1548 = vpow.pop %v1547
  %v1549 = vmul.f32 %v1510, 1.442695
  %v1550 = vpow.pop %v1549
  %v1551 = vmul.f32 %v1511, 1.442695
  %v1552 = vpow.pop %v1551
  %v1553 = vmul.f32 %v1512, 1.442695
  %v1554 = vpow.pop %v1553
  %v1555 = vmul.f32 %v1513, 1.442695
  %v1556 = vpow.pop %v1555
  %v1557 = vmul.f32 %v1514, 1.442695
  %v1558 = vpow.pop %v1557
  %v1559 = vmul.f32 %v1515, 1.442695
  %v1560 = vpow.pop %v1559
  %v1561 = vmul.f32 %v1516, 1.442695
  %v1562 = vpow.pop %v1561
  %v1563 = vmul.f32 %v1517, 1.442695
  %v1564 = vpow.pop %v1563
  %v1565 = vmul.f32 %v1518, 1.442695
  %v1566 = vpow.pop %v1565
  %v1567 = vmul.f32 %v1519, 1.442695
  %v1568 = vpow.pop %v1567
  %v1569 = vmul.f32 %v1520, 1.442695
  %v1570 = vpow.pop %v1569
  %v1571 = vmul.f32 %v1521, 1.442695
  %v1572 = vpow.pop %v1571
  %v1573 = vmul.f32 %v1522, 1.442695
  %v1574 = vpow.pop %v1573
  %v1575 = vmul.f32 %v1523, 1.442695
  %v1576 = vpow.pop %v1575
  %v1577 = vmul.f32 %v1524, 1.442695
  %v1578 = vpow.pop %v1577
  %v1579 = vmul.f32 %v1525, 1.442695
  %v1580 = vpow.pop %v1579
  %v1581 = vmul.f32 %v1526, 1.442695
  %v1582 = vpow.pop %v1581
  %v1583 = vmul.f32 %v1527, 1.442695
  %v1584 = vpow.pop %v1583
  %v1585 = vmul.f32 %v1528, 1.442695
  %v1586 = vpow.pop %v1585
  %v1587 = vmul.f32 %v1529, 1.442695
  %v1588 = vpow.pop %v1587
  %v1589 = vmul.f32 %v1530, 1.442695
  %v1590 = vpow.pop %v1589
  %v1591 = vmul.f32 %v1531, 1.442695
  %v1592 = vpow.pop %v1591
  %v1593 = vmul.f32 %v1532, 1.442695
  %v1594 = vpow.pop %v1593
  %v1595 = vmul.f32 %v1533, 1.442695
  %v1596 = vpow.pop %v1595
  %v1597 = vmul.f32 %v1534, 1.442695
  %v1598 = vpow.pop %v1597
  %v1599 = vsub.f32 %v1536, 1.0
  %v1600 = vsub.f32 %v1538, 1.0
  %v1601 = vsub.f32 %v1540, 1.0
  %v1602 = vsub.f32 %v1542, 1.0
  %v1603 = vsub.f32 %v1544, 1.0
  %v1604 = vsub.f32 %v1546, 1.0
  %v1605 = vsub.f32 %v1548, 1.0
  %v1606 = vsub.f32 %v1550, 1.0
  %v1607 = vsub.f32 %v1552, 1.0
  %v1608 = vsub.f32 %v1554, 1.0
  %v1609 = vsub.f32 %v1556, 1.0
  %v1610 = vsub.f32 %v1558, 1.0
  %v1611 = vsub.f32 %v1560, 1.0
  %v1612 = vsub.f32 %v1562, 1.0
  %v1613 = vsub.f32 %v1564, 1.0
  %v1614 = vsub.f32 %v1566, 1.0
  %v1615 = vsub.f32 %v1568, 1.0
  %v1616 = vsub.f32 %v1570, 1.0
  %v1617 = vsub.f32 %v1572, 1.0
  %v1618 = vsub.f32 %v1574, 1.0
  %v1619 = vsub.f32 %v1576, 1.0
  %v1620 = vsub.f32 %v1578, 1.0
  %v1621 = vsub.f32 %v1580, 1.0
  %v1622 = vsub.f32 %v1582, 1.0
  %v1623 = vsub.f32 %v1584, 1.0
  %v1624 = vsub.f32 %v1586, 1.0
  %v1625 = vsub.f32 %v1588, 1.0
  %v1626 = vsub.f32 %v1590, 1.0
  %v1627 = vsub.f32 %v1592, 1.0
  %v1628 = vsub.f32 %v1594, 1.0
  %v1629 = vsub.f32 %v1596, 1.0
  %v1630 = vsub.f32 %v1598, 1.0
  %v1631 = vmul.f32 %v1599, 1.6732632
  %v1632 = vmul.f32 %v1600, 1.6732632
  %v1633 = vmul.f32 %v1601, 1.6732632
  %v1634 = vmul.f32 %v1602, 1.6732632
  %v1635 = vmul.f32 %v1603, 1.6732632
  %v1636 = vmul.f32 %v1604, 1.6732632
  %v1637 = vmul.f32 %v1605, 1.6732632
  %v1638 = vmul.f32 %v1606, 1.6732632
  %v1639 = vmul.f32 %v1607, 1.6732632
  %v1640 = vmul.f32 %v1608, 1.6732632
  %v1641 = vmul.f32 %v1609, 1.6732632
  %v1642 = vmul.f32 %v1610, 1.6732632
  %v1643 = vmul.f32 %v1611, 1.6732632
  %v1644 = vmul.f32 %v1612, 1.6732632
  %v1645 = vmul.f32 %v1613, 1.6732632
  %v1646 = vmul.f32 %v1614, 1.6732632
  %v1647 = vmul.f32 %v1615, 1.6732632
  %v1648 = vmul.f32 %v1616, 1.6732632
  %v1649 = vmul.f32 %v1617, 1.6732632
  %v1650 = vmul.f32 %v1618, 1.6732632
  %v1651 = vmul.f32 %v1619, 1.6732632
  %v1652 = vmul.f32 %v1620, 1.6732632
  %v1653 = vmul.f32 %v1621, 1.6732632
  %v1654 = vmul.f32 %v1622, 1.6732632
  %v1655 = vmul.f32 %v1623, 1.6732632
  %v1656 = vmul.f32 %v1624, 1.6732632
  %v1657 = vmul.f32 %v1625, 1.6732632
  %v1658 = vmul.f32 %v1626, 1.6732632
  %v1659 = vmul.f32 %v1627, 1.6732632
  %v1660 = vmul.f32 %v1628, 1.6732632
  %v1661 = vmul.f32 %v1629, 1.6732632
  %v1662 = vmul.f32 %v1630, 1.6732632
  %v1663 = vsel %vm1471, %v1345, %v1631
  %v1664 = vsel %vm1472, %v1348, %v1632
  %v1665 = vsel %vm1473, %v1353, %v1633
  %v1666 = vsel %vm1474, %v1356, %v1634
  %v1667 = vsel %vm1475, %v1361, %v1635
  %v1668 = vsel %vm1476, %v1364, %v1636
  %v1669 = vsel %vm1477, %v1369, %v1637
  %v1670 = vsel %vm1478, %v1372, %v1638
  %v1671 = vsel %vm1479, %v1377, %v1639
  %v1672 = vsel %vm1480, %v1380, %v1640
  %v1673 = vsel %vm1481, %v1385, %v1641
  %v1674 = vsel %vm1482, %v1388, %v1642
  %v1675 = vsel %vm1483, %v1393, %v1643
  %v1676 = vsel %vm1484, %v1396, %v1644
  %v1677 = vsel %vm1485, %v1401, %v1645
  %v1678 = vsel %vm1486, %v1404, %v1646
  %v1679 = vsel %vm1487, %v1409, %v1647
  %v1680 = vsel %vm1488, %v1412, %v1648
  %v1681 = vsel %vm1489, %v1417, %v1649
  %v1682 = vsel %vm1490, %v1420, %v1650
  %v1683 = vsel %vm1491, %v1425, %v1651
  %v1684 = vsel %vm1492, %v1428, %v1652
  %v1685 = vsel %vm1493, %v1433, %v1653
  %v1686 = vsel %vm1494, %v1436, %v1654
  %v1687 = vsel %vm1495, %v1441, %v1655
  %v1688 = vsel %vm1496, %v1444, %v1656
  %v1689 = vsel %vm1497, %v1449, %v1657
  %v1690 = vsel %vm1498, %v1452, %v1658
  %v1691 = vsel %vm1499, %v1457, %v1659
  %v1692 = vsel %vm1500, %v1460, %v1660
  %v1693 = vsel %vm1501, %v1465, %v1661
  %v1694 = vsel %vm1502, %v1468, %v1662
  %v1695 = vmul.f32 %v1663, 1.050701
  %v1696 = vmul.f32 %v1664, 1.050701
  %v1697 = vmul.f32 %v1665, 1.050701
  %v1698 = vmul.f32 %v1666, 1.050701
  %v1699 = vmul.f32 %v1667, 1.050701
  %v1700 = vmul.f32 %v1668, 1.050701
  %v1701 = vmul.f32 %v1669, 1.050701
  %v1702 = vmul.f32 %v1670, 1.050701
  %v1703 = vmul.f32 %v1671, 1.050701
  %v1704 = vmul.f32 %v1672, 1.050701
  %v1705 = vmul.f32 %v1673, 1.050701
  %v1706 = vmul.f32 %v1674, 1.050701
  %v1707 = vmul.f32 %v1675, 1.050701
  %v1708 = vmul.f32 %v1676, 1.050701
  %v1709 = vmul.f32 %v1677, 1.050701
  %v1710 = vmul.f32 %v1678, 1.050701
  %v1711 = vmul.f32 %v1679, 1.050701
  %v1712 = vmul.f32 %v1680, 1.050701
  %v1713 = vmul.f32 %v1681, 1.050701
  %v1714 = vmul.f32 %v1682, 1.050701
  %v1715 = vmul.f32 %v1683, 1.050701
  %v1716 = vmul.f32 %v1684, 1.050701
  %v1717 = vmul.f32 %v1685, 1.050701
  %v1718 = vmul.f32 %v1686, 1.050701
  %v1719 = vmul.f32 %v1687, 1.050701
  %v1720 = vmul.f32 %v1688, 1.050701
  %v1721 = vmul.f32 %v1689, 1.050701
  %v1722 = vmul.f32 %v1690, 1.050701
  %v1723 = vmul.f32 %v1691, 1.050701
  %v1724 = vmul.f32 %v1692, 1.050701
  %v1725 = vmul.f32 %v1693, 1.050701
  %v1726 = vmul.f32 %v1694, 1.050701
  %v1727 = vld [vmem:[%s5] sm:$0x1]
  %v1729 = vlaneseq
  %v1730 = vshrl.u32 %v1729, 7
  %v1731 = vsub.s32 0, %v1730
  %v1732 = vrot.slane %v1727, %v1731
  %v1734 = vadd.f32 %v1695, %v1732
  %v1735 = vadd.f32 %v1696, %v1732
  %v1736 = vadd.f32 %v1697, %v1732
  %v1737 = vadd.f32 %v1698, %v1732
  %v1738 = vadd.f32 %v1699, %v1732
  %v1739 = vadd.f32 %v1700, %v1732
  %v1740 = vadd.f32 %v1701, %v1732
  %v1741 = vadd.f32 %v1702, %v1732
  %v1742 = vadd.f32 %v1703, %v1732
  %v1743 = vadd.f32 %v1704, %v1732
  %v1744 = vadd.f32 %v1705, %v1732
  %v1745 = vadd.f32 %v1706, %v1732
  %v1746 = vadd.f32 %v1707, %v1732
  %v1747 = vadd.f32 %v1708, %v1732
  %v1748 = vadd.f32 %v1709, %v1732
  %v1749 = vadd.f32 %v1710, %v1732
  %v1750 = vadd.f32 %v1711, %v1732
  %v1751 = vadd.f32 %v1712, %v1732
  %v1752 = vadd.f32 %v1713, %v1732
  %v1753 = vadd.f32 %v1714, %v1732
  %v1754 = vadd.f32 %v1715, %v1732
  %v1755 = vadd.f32 %v1716, %v1732
  %v1756 = vadd.f32 %v1717, %v1732
  %v1757 = vadd.f32 %v1718, %v1732
  %v1758 = vadd.f32 %v1719, %v1732
  %v1759 = vadd.f32 %v1720, %v1732
  %v1760 = vadd.f32 %v1721, %v1732
  %v1761 = vadd.f32 %v1722, %v1732
  %v1762 = vadd.f32 %v1723, %v1732
  %v1763 = vadd.f32 %v1724, %v1732
  %v1764 = vadd.f32 %v1725, %v1732
  %v1765 = vadd.f32 %v1726, %v1732
  %v1766 = vpack.c.bf16 %v1735, %v1734
  %v1767 = vpack.c.bf16 %v1737, %v1736
  %v1768 = vpack.c.bf16 %v1739, %v1738
  %v1769 = vpack.c.bf16 %v1741, %v1740
  %v1770 = vpack.c.bf16 %v1743, %v1742
  %v1771 = vpack.c.bf16 %v1745, %v1744
  %v1772 = vpack.c.bf16 %v1747, %v1746
  %v1773 = vpack.c.bf16 %v1749, %v1748
  %v1774 = vpack.c.bf16 %v1751, %v1750
  %v1775 = vpack.c.bf16 %v1753, %v1752
  %v1776 = vpack.c.bf16 %v1755, %v1754
  %v1777 = vpack.c.bf16 %v1757, %v1756
  %v1778 = vpack.c.bf16 %v1759, %v1758
  %v1779 = vpack.c.bf16 %v1761, %v1760
  %v1780 = vpack.c.bf16 %v1763, %v1762
  %v1781 = vpack.c.bf16 %v1765, %v1764
  %v1782 = vld [vmem:[%s6] sm:$0xf]
  %v1783 = vld [vmem:[%s6 + $0x4] sm:$0xf]
  %v1784 = vld [vmem:[%s6 + $0x8] sm:$0xf]
  %v1785 = vld [vmem:[%s6 + $0xc] sm:$0xf]
  %v1786 = vld [vmem:[%s6 + $0x10] sm:$0xf]
  %v1787 = vld [vmem:[%s6 + $0x14] sm:$0xf]
  %v1788 = vld [vmem:[%s6 + $0x18] sm:$0xf]
  %v1789 = vld [vmem:[%s6 + $0x1c] sm:$0xf]
  %v1790 = vld [vmem:[%s6 + $0x20] sm:$0xf]
  %v1791 = vld [vmem:[%s6 + $0x24] sm:$0xf]
  %v1792 = vld [vmem:[%s6 + $0x28] sm:$0xf]
  %v1793 = vld [vmem:[%s6 + $0x2c] sm:$0xf]
  %v1794 = vld [vmem:[%s6 + $0x30] sm:$0xf]
  %v1795 = vld [vmem:[%s6 + $0x34] sm:$0xf]
  %v1796 = vld [vmem:[%s6 + $0x38] sm:$0xf]
  %v1797 = vld [vmem:[%s6 + $0x3c] sm:$0xf]
  %v1814 = vunpack.c.l.b16 %v1782
  %v1815 = vunpack.c.l.b16 %v1783
  %v1816 = vunpack.c.l.b16 %v1784
  %v1817 = vunpack.c.l.b16 %v1785
  %v1818 = vunpack.c.l.b16 %v1786
  %v1819 = vunpack.c.l.b16 %v1787
  %v1820 = vunpack.c.l.b16 %v1788
  %v1821 = vunpack.c.l.b16 %v1789
  %v1822 = vunpack.c.l.b16 %v1790
  %v1823 = vunpack.c.l.b16 %v1791
  %v1824 = vunpack.c.l.b16 %v1792
  %v1825 = vunpack.c.l.b16 %v1793
  %v1826 = vunpack.c.l.b16 %v1794
  %v1827 = vunpack.c.l.b16 %v1795
  %v1828 = vunpack.c.l.b16 %v1796
  %v1829 = vunpack.c.l.b16 %v1797
  %v1830 = vpack.c.b16 %v1815, %v1814
  %v1831 = vpack.c.b16 %v1817, %v1816
  %v1832 = vpack.c.b16 %v1819, %v1818
  %v1833 = vpack.c.b16 %v1821, %v1820
  %v1834 = vpack.c.b16 %v1823, %v1822
  %v1835 = vpack.c.b16 %v1825, %v1824
  %v1836 = vpack.c.b16 %v1827, %v1826
  %v1837 = vpack.c.b16 %v1829, %v1828
  %1846 = vmatprep.subr.bf16.mxu0 0
  %1847 = vmatpush1.bf16.msra.mxu0 %v1830
  %1848 = vmatprep.subr.bf16.mxu0 0
  %1849 = vmatpush1.bf16.msra.mxu0 %v1831
  %1850 = vmatprep.subr.bf16.mxu0 0
  %1851 = vmatpush1.bf16.msra.mxu0 %v1832
  %1852 = vmatprep.subr.bf16.mxu0 0
  %1853 = vmatpush1.bf16.msra.mxu0 %v1833
  %1854 = vmatprep.subr.bf16.mxu0 0
  %1855 = vmatpush1.bf16.msra.mxu0 %v1834
  %1856 = vmatprep.subr.bf16.mxu0 0
  %1857 = vmatpush1.bf16.msra.mxu0 %v1835
  %1858 = vmatprep.subr.bf16.mxu0 0
  %1859 = vmatpush1.bf16.msra.mxu0 %v1836
  %1860 = vmatprep.subr.bf16.mxu0 0
  %1861 = vmatpush1.bf16.msra.mxu0 %v1837
  %1862 = vmatprep.subr.bf16.mxu0 0
  %1863 = vmatpush1.bf16.msra.mxu0 0
  %1864 = vmatprep.subr.bf16.mxu0 0
  %1865 = vmatpush1.bf16.msra.mxu0 0
  %1866 = vmatprep.subr.bf16.mxu0 0
  %1867 = vmatpush1.bf16.msra.mxu0 0
  %1868 = vmatprep.subr.bf16.mxu0 0
  %1869 = vmatpush1.bf16.msra.mxu0 0
  %1870 = vmatprep.subr.bf16.mxu0 0
  %1871 = vmatpush1.bf16.msra.mxu0 0
  %1872 = vmatprep.subr.bf16.mxu0 0
  %1873 = vmatpush1.bf16.msra.mxu0 0
  %1874 = vmatprep.subr.bf16.mxu0 0
  %1875 = vmatpush1.bf16.msra.mxu0 0
  %1876 = vmatprep.subr.bf16.mxu0 0
  %1877 = vmatpush1.bf16.msra.mxu0 0
  %1878 = vmatprep.mubr.bf16.mxu0 0
  %1879 = vmatmul.mubr.bf16.gmra.mrb[0].mxu0 %v1766
  %v1880 = vpop.f32.mrb[0].mxu0
  %v1881 = vadd.f32 0.0, %v1880
  %v1882 = vpop.f32.mrb[0].mxu0
  %v1883 = vpop.f32.mrb[0].mxu0
  %v1884 = vadd.f32 0.0, %v1883
  %v1885 = vpop.f32.mrb[0].mxu0
  %1886 = vmatprep.mubr.bf16.mxu0 0
  %1887 = vmatmul.mubr.bf16.gmra.mrb[0].mxu0 %v1767
  %v1888 = vpop.f32.mrb[0].mxu0
  %v1889 = vadd.f32 0.0, %v1888
  %v1890 = vpop.f32.mrb[0].mxu0
  %v1891 = vpop.f32.mrb[0].mxu0
  %v1892 = vadd.f32 0.0, %v1891
  %v1893 = vpop.f32.mrb[0].mxu0
  %1894 = vmatprep.mubr.bf16.mxu0 0
  %1895 = vmatmul.mubr.bf16.gmra.mrb[0].mxu0 %v1768
  %v1896 = vpop.f32.mrb[0].mxu0
  %v1897 = vadd.f32 0.0, %v1896
  %v1898 = vpop.f32.mrb[0].mxu0
  %v1899 = vpop.f32.mrb[0].mxu0
  %v1900 = vadd.f32 0.0, %v1899
  %v1901 = vpop.f32.mrb[0].mxu0
  %1902 = vmatprep.mubr.bf16.mxu0 0
  %1903 = vmatmul.mubr.bf16.gmra.mrb[0].mxu0 %v1769
  %v1904 = vpop.f32.mrb[0].mxu0
  %v1905 = vadd.f32 0.0, %v1904
  %v1906 = vpop.f32.mrb[0].mxu0
  %v1907 = vpop.f32.mrb[0].mxu0
  %v1908 = vadd.f32 0.0, %v1907
  %v1909 = vpop.f32.mrb[0].mxu0
  %1910 = vmatprep.mubr.bf16.mxu0 0
  %1911 = vmatmul.mubr.bf16.gmra.mrb[0].mxu0 %v1770
  %v1912 = vpop.f32.mrb[0].mxu0
  %v1913 = vadd.f32 0.0, %v1912
  %v1914 = vpop.f32.mrb[0].mxu0
  %v1915 = vpop.f32.mrb[0].mxu0
  %v1916 = vadd.f32 0.0, %v1915
  %v1917 = vpop.f32.mrb[0].mxu0
  %1918 = vmatprep.mubr.bf16.mxu0 0
  %1919 = vmatmul.mubr.bf16.gmra.mrb[0].mxu0 %v1771
  %v1920 = vpop.f32.mrb[0].mxu0
  %v1921 = vadd.f32 0.0, %v1920
  %v1922 = vpop.f32.mrb[0].mxu0
  %v1923 = vpop.f32.mrb[0].mxu0
  %v1924 = vadd.f32 0.0, %v1923
  %v1925 = vpop.f32.mrb[0].mxu0
  %1926 = vmatprep.mubr.bf16.mxu0 0
  %1927 = vmatmul.mubr.bf16.gmra.mrb[0].mxu0 %v1772
  %v1928 = vpop.f32.mrb[0].mxu0
  %v1929 = vadd.f32 0.0, %v1928
  %v1930 = vpop.f32.mrb[0].mxu0
  %v1931 = vpop.f32.mrb[0].mxu0
  %v1932 = vadd.f32 0.0, %v1931
  %v1933 = vpop.f32.mrb[0].mxu0
  %1934 = vmatprep.mubr.bf16.mxu0 0
  %1935 = vmatmul.mubr.bf16.gmra.mrb[0].mxu0 %v1773
  %v1936 = vpop.f32.mrb[0].mxu0
  %v1937 = vadd.f32 0.0, %v1936
  %v1938 = vpop.f32.mrb[0].mxu0
  %v1939 = vpop.f32.mrb[0].mxu0
  %v1940 = vadd.f32 0.0, %v1939
  %v1941 = vpop.f32.mrb[0].mxu0
  %1942 = vmatprep.mubr.bf16.mxu0 0
  %1943 = vmatmul.mubr.bf16.gmra.mrb[0].mxu0 %v1774
  %v1944 = vpop.f32.mrb[0].mxu0
  %v1945 = vadd.f32 0.0, %v1944
  %v1946 = vpop.f32.mrb[0].mxu0
  %v1947 = vpop.f32.mrb[0].mxu0
  %v1948 = vadd.f32 0.0, %v1947
  %v1949 = vpop.f32.mrb[0].mxu0
  %1950 = vmatprep.mubr.bf16.mxu0 0
  %1951 = vmatmul.mubr.bf16.gmra.mrb[0].mxu0 %v1775
  %v1952 = vpop.f32.mrb[0].mxu0
  %v1953 = vadd.f32 0.0, %v1952
  %v1954 = vpop.f32.mrb[0].mxu0
  %v1955 = vpop.f32.mrb[0].mxu0
  %v1956 = vadd.f32 0.0, %v1955
  %v1957 = vpop.f32.mrb[0].mxu0
  %1958 = vmatprep.mubr.bf16.mxu0 0
  %1959 = vmatmul.mubr.bf16.gmra.mrb[0].mxu0 %v1776
  %v1960 = vpop.f32.mrb[0].mxu0
  %v1961 = vadd.f32 0.0, %v1960
  %v1962 = vpop.f32.mrb[0].mxu0
  %v1963 = vpop.f32.mrb[0].mxu0
  %v1964 = vadd.f32 0.0, %v1963
  %v1965 = vpop.f32.mrb[0].mxu0
  %1966 = vmatprep.mubr.bf16.mxu0 0
  %1967 = vmatmul.mubr.bf16.gmra.mrb[0].mxu0 %v1777
  %v1968 = vpop.f32.mrb[0].mxu0
  %v1969 = vadd.f32 0.0, %v1968
  %v1970 = vpop.f32.mrb[0].mxu0
  %v1971 = vpop.f32.mrb[0].mxu0
  %v1972 = vadd.f32 0.0, %v1971
  %v1973 = vpop.f32.mrb[0].mxu0
  %1974 = vmatprep.mubr.bf16.mxu0 0
  %1975 = vmatmul.mubr.bf16.gmra.mrb[0].mxu0 %v1778
  %v1976 = vpop.f32.mrb[0].mxu0
  %v1977 = vadd.f32 0.0, %v1976
  %v1978 = vpop.f32.mrb[0].mxu0
  %v1979 = vpop.f32.mrb[0].mxu0
  %v1980 = vadd.f32 0.0, %v1979
  %v1981 = vpop.f32.mrb[0].mxu0
  %1982 = vmatprep.mubr.bf16.mxu0 0
  %1983 = vmatmul.mubr.bf16.gmra.mrb[0].mxu0 %v1779
  %v1984 = vpop.f32.mrb[0].mxu0
  %v1985 = vadd.f32 0.0, %v1984
  %v1986 = vpop.f32.mrb[0].mxu0
  %v1987 = vpop.f32.mrb[0].mxu0
  %v1988 = vadd.f32 0.0, %v1987
  %v1989 = vpop.f32.mrb[0].mxu0
  %1990 = vmatprep.mubr.bf16.mxu0 0
  %1991 = vmatmul.mubr.bf16.gmra.mrb[0].mxu0 %v1780
  %v1992 = vpop.f32.mrb[0].mxu0
  %v1993 = vadd.f32 0.0, %v1992
  %v1994 = vpop.f32.mrb[0].mxu0
  %v1995 = vpop.f32.mrb[0].mxu0
  %v1996 = vadd.f32 0.0, %v1995
  %v1997 = vpop.f32.mrb[0].mxu0
  %1998 = vmatprep.mubr.bf16.mxu0 0
  %1999 = vmatmul.mubr.bf16.gmra.mrb[0].mxu0 %v1781
  %v2000 = vpop.f32.mrb[0].mxu0
  %v2001 = vadd.f32 0.0, %v2000
  %v2002 = vpop.f32.mrb[0].mxu0
  %v2003 = vpop.f32.mrb[0].mxu0
  %v2004 = vadd.f32 0.0, %v2003
  %v2005 = vpop.f32.mrb[0].mxu0
  %2006 = vdwg.mxu0
  %v2007 = vpack.c.bf16 %v1884, %v1881
  %v2008 = vpack.c.bf16 %v1892, %v1889
  %v2009 = vpack.c.bf16 %v1900, %v1897
  %v2010 = vpack.c.bf16 %v1908, %v1905
  %v2011 = vpack.c.bf16 %v1916, %v1913
  %v2012 = vpack.c.bf16 %v1924, %v1921
  %v2013 = vpack.c.bf16 %v1932, %v1929
  %v2014 = vpack.c.bf16 %v1940, %v1937
  %v2015 = vpack.c.bf16 %v1948, %v1945
  %v2016 = vpack.c.bf16 %v1956, %v1953
  %v2017 = vpack.c.bf16 %v1964, %v1961
  %v2018 = vpack.c.bf16 %v1972, %v1969
  %v2019 = vpack.c.bf16 %v1980, %v1977
  %v2020 = vpack.c.bf16 %v1988, %v1985
  %v2021 = vpack.c.bf16 %v1996, %v1993
  %v2022 = vpack.c.bf16 %v2004, %v2001
  %2023 = vmatprep.subr.bf16.mxu0 0
  %2024 = vmatpush1.bf16.msra.mxu0 %v2007
  %2025 = vmatprep.subr.bf16.mxu0 0
  %2026 = vmatpush1.bf16.msra.mxu0 %v2008
  %2027 = vmatprep.subr.bf16.mxu0 0
  %2028 = vmatpush1.bf16.msra.mxu0 %v2009
  %2029 = vmatprep.subr.bf16.mxu0 0
  %2030 = vmatpush1.bf16.msra.mxu0 %v2010
  %2031 = vmatprep.subr.bf16.mxu0 0
  %2032 = vmatpush1.bf16.msra.mxu0 %v2011
  %2033 = vmatprep.subr.bf16.mxu0 0
  %2034 = vmatpush1.bf16.msra.mxu0 %v2012
  %2035 = vmatprep.subr.bf16.mxu0 0
  %2036 = vmatpush1.bf16.msra.mxu0 %v2013
  %2037 = vmatprep.subr.bf16.mxu0 0
  %2038 = vmatpush1.bf16.msra.mxu0 %v2014
  %2039 = vmatprep.subr.bf16.mxu0 0
  %2040 = vmatpush1.bf16.msra.mxu0 %v2015
  %2041 = vmatprep.subr.bf16.mxu0 0
  %2042 = vmatpush1.bf16.msra.mxu0 %v2016
  %2043 = vmatprep.subr.bf16.mxu0 0
  %2044 = vmatpush1.bf16.msra.mxu0 %v2017
  %2045 = vmatprep.subr.bf16.mxu0 0
  %2046 = vmatpush1.bf16.msra.mxu0 %v2018
  %2047 = vmatprep.subr.bf16.mxu0 0
  %2048 = vmatpush1.bf16.msra.mxu0 %v2019
  %2049 = vmatprep.subr.bf16.mxu0 0
  %2050 = vmatpush1.bf16.msra.mxu0 %v2020
  %2051 = vmatprep.subr.bf16.mxu0 0
  %2052 = vmatpush1.bf16.msra.mxu0 %v2021
  %2053 = vmatprep.subr.bf16.mxu0 0
  %2054 = vmatpush1.bf16.msra.mxu0 %v2022
  %2055 = vmatprep.mubr.bf16.mxu0 %v534
  %2056 = vmatmul.mubr.bf16.gmra.mrb[0].mxu0 %v533
  %v2057 = vpop.f32.mrb[0].mxu0
  %v2058 = vadd.f32 0.0, %v2057
  %v2059 = vpop.f32.mrb[0].mxu0
  %v2060 = vpop.f32.mrb[0].mxu0
  %v2061 = vadd.f32 0.0, %v2060
  %v2062 = vpop.f32.mrb[0].mxu0
  %2063 = vmatprep.mubr.bf16.mxu0 %v536
  %2064 = vmatmul.mubr.bf16.gmra.mrb[0].mxu0 %v535
  %v2065 = vpop.f32.mrb[0].mxu0
  %v2066 = vadd.f32 0.0, %v2065
  %v2067 = vpop.f32.mrb[0].mxu0
  %v2068 = vpop.f32.mrb[0].mxu0
  %v2069 = vadd.f32 0.0, %v2068
  %v2070 = vpop.f32.mrb[0].mxu0
  %2071 = vmatprep.mubr.bf16.mxu0 %v538
  %2072 = vmatmul.mubr.bf16.gmra.mrb[0].mxu0 %v537
  %v2073 = vpop.f32.mrb[0].mxu0
  %v2074 = vadd.f32 0.0, %v2073
  %v2075 = vpop.f32.mrb[0].mxu0
  %v2076 = vpop.f32.mrb[0].mxu0
  %v2077 = vadd.f32 0.0, %v2076
  %v2078 = vpop.f32.mrb[0].mxu0
  %2079 = vmatprep.mubr.bf16.mxu0 %v540
  %2080 = vmatmul.mubr.bf16.gmra.mrb[0].mxu0 %v539
  %v2081 = vpop.f32.mrb[0].mxu0
  %v2082 = vadd.f32 0.0, %v2081
  %v2083 = vpop.f32.mrb[0].mxu0
  %v2084 = vpop.f32.mrb[0].mxu0
  %v2085 = vadd.f32 0.0, %v2084
  %v2086 = vpop.f32.mrb[0].mxu0
  %2087 = vmatprep.mubr.bf16.mxu0 %v542
  %2088 = vmatmul.mubr.bf16.gmra.mrb[0].mxu0 %v541
  %v2089 = vpop.f32.mrb[0].mxu0
  %v2090 = vadd.f32 0.0, %v2089
  %v2091 = vpop.f32.mrb[0].mxu0
  %v2092 = vpop.f32.mrb[0].mxu0
  %v2093 = vadd.f32 0.0, %v2092
  %v2094 = vpop.f32.mrb[0].mxu0
  %2095 = vmatprep.mubr.bf16.mxu0 %v544
  %2096 = vmatmul.mubr.bf16.gmra.mrb[0].mxu0 %v543
  %v2097 = vpop.f32.mrb[0].mxu0
  %v2098 = vadd.f32 0.0, %v2097
  %v2099 = vpop.f32.mrb[0].mxu0
  %v2100 = vpop.f32.mrb[0].mxu0
  %v2101 = vadd.f32 0.0, %v2100
  %v2102 = vpop.f32.mrb[0].mxu0
  %2103 = vmatprep.mubr.bf16.mxu0 %v546
  %2104 = vmatmul.mubr.bf16.gmra.mrb[0].mxu0 %v545
  %v2105 = vpop.f32.mrb[0].mxu0
  %v2106 = vadd.f32 0.0, %v2105
  %v2107 = vpop.f32.mrb[0].mxu0
  %v2108 = vpop.f32.mrb[0].mxu0
  %v2109 = vadd.f32 0.0, %v2108
  %v2110 = vpop.f32.mrb[0].mxu0
  %2111 = vmatprep.mubr.bf16.mxu0 %v548
  %2112 = vmatmul.mubr.bf16.gmra.mrb[0].mxu0 %v547
  %v2113 = vpop.f32.mrb[0].mxu0
  %v2114 = vadd.f32 0.0, %v2113
  %v2115 = vpop.f32.mrb[0].mxu0
  %v2116 = vpop.f32.mrb[0].mxu0
  %v2117 = vadd.f32 0.0, %v2116
  %v2118 = vpop.f32.mrb[0].mxu0
  %2119 = vmatprep.mubr.bf16.mxu0 %v550
  %2120 = vmatmul.mubr.bf16.gmra.mrb[0].mxu0 %v549
  %v2121 = vpop.f32.mrb[0].mxu0
  %v2122 = vadd.f32 0.0, %v2121
  %v2123 = vpop.f32.mrb[0].mxu0
  %v2124 = vpop.f32.mrb[0].mxu0
  %v2125 = vadd.f32 0.0, %v2124
  %v2126 = vpop.f32.mrb[0].mxu0
  %2127 = vmatprep.mubr.bf16.mxu0 %v552
  %2128 = vmatmul.mubr.bf16.gmra.mrb[0].mxu0 %v551
  %v2129 = vpop.f32.mrb[0].mxu0
  %v2130 = vadd.f32 0.0, %v2129
  %v2131 = vpop.f32.mrb[0].mxu0
  %v2132 = vpop.f32.mrb[0].mxu0
  %v2133 = vadd.f32 0.0, %v2132
  %v2134 = vpop.f32.mrb[0].mxu0
  %2135 = vmatprep.mubr.bf16.mxu0 %v554
  %2136 = vmatmul.mubr.bf16.gmra.mrb[0].mxu0 %v553
  %v2137 = vpop.f32.mrb[0].mxu0
  %v2138 = vadd.f32 0.0, %v2137
  %v2139 = vpop.f32.mrb[0].mxu0
  %v2140 = vpop.f32.mrb[0].mxu0
  %v2141 = vadd.f32 0.0, %v2140
  %v2142 = vpop.f32.mrb[0].mxu0
  %2143 = vmatprep.mubr.bf16.mxu0 %v556
  %2144 = vmatmul.mubr.bf16.gmra.mrb[0].mxu0 %v555
  %v2145 = vpop.f32.mrb[0].mxu0
  %v2146 = vadd.f32 0.0, %v2145
  %v2147 = vpop.f32.mrb[0].mxu0
  %v2148 = vpop.f32.mrb[0].mxu0
  %v2149 = vadd.f32 0.0, %v2148
  %v2150 = vpop.f32.mrb[0].mxu0
  %2151 = vmatprep.mubr.bf16.mxu0 %v558
  %2152 = vmatmul.mubr.bf16.gmra.mrb[0].mxu0 %v557
  %v2153 = vpop.f32.mrb[0].mxu0
  %v2154 = vadd.f32 0.0, %v2153
  %v2155 = vpop.f32.mrb[0].mxu0
  %v2156 = vpop.f32.mrb[0].mxu0
  %v2157 = vadd.f32 0.0, %v2156
  %v2158 = vpop.f32.mrb[0].mxu0
  %2159 = vmatprep.mubr.bf16.mxu0 %v560
  %2160 = vmatmul.mubr.bf16.gmra.mrb[0].mxu0 %v559
  %v2161 = vpop.f32.mrb[0].mxu0
  %v2162 = vadd.f32 0.0, %v2161
  %v2163 = vpop.f32.mrb[0].mxu0
  %v2164 = vpop.f32.mrb[0].mxu0
  %v2165 = vadd.f32 0.0, %v2164
  %v2166 = vpop.f32.mrb[0].mxu0
  %2167 = vmatprep.mubr.bf16.mxu0 %v562
  %2168 = vmatmul.mubr.bf16.gmra.mrb[0].mxu0 %v561
  %v2169 = vpop.f32.mrb[0].mxu0
  %v2170 = vadd.f32 0.0, %v2169
  %v2171 = vpop.f32.mrb[0].mxu0
  %v2172 = vpop.f32.mrb[0].mxu0
  %v2173 = vadd.f32 0.0, %v2172
  %v2174 = vpop.f32.mrb[0].mxu0
  %2175 = vmatprep.mubr.bf16.mxu0 %v564
  %2176 = vmatmul.mubr.bf16.gmra.mrb[0].mxu0 %v563
  %v2177 = vpop.f32.mrb[0].mxu0
  %v2178 = vadd.f32 0.0, %v2177
  %v2179 = vpop.f32.mrb[0].mxu0
  %v2180 = vpop.f32.mrb[0].mxu0
  %v2181 = vadd.f32 0.0, %v2180
  %v2182 = vpop.f32.mrb[0].mxu0
  %2183 = vdwg.mxu0
  %vm2184 = vcmp.gt.f32.partialorder %v2058, 0.0
  %vm2185 = vcmp.gt.f32.partialorder %v2061, 0.0
  %vm2186 = vcmp.gt.f32.partialorder %v2066, 0.0
  %vm2187 = vcmp.gt.f32.partialorder %v2069, 0.0
  %vm2188 = vcmp.gt.f32.partialorder %v2074, 0.0
  %vm2189 = vcmp.gt.f32.partialorder %v2077, 0.0
  %vm2190 = vcmp.gt.f32.partialorder %v2082, 0.0
  %vm2191 = vcmp.gt.f32.partialorder %v2085, 0.0
  %vm2192 = vcmp.gt.f32.partialorder %v2090, 0.0
  %vm2193 = vcmp.gt.f32.partialorder %v2093, 0.0
  %vm2194 = vcmp.gt.f32.partialorder %v2098, 0.0
  %vm2195 = vcmp.gt.f32.partialorder %v2101, 0.0
  %vm2196 = vcmp.gt.f32.partialorder %v2106, 0.0
  %vm2197 = vcmp.gt.f32.partialorder %v2109, 0.0
  %vm2198 = vcmp.gt.f32.partialorder %v2114, 0.0
  %vm2199 = vcmp.gt.f32.partialorder %v2117, 0.0
  %vm2200 = vcmp.gt.f32.partialorder %v2122, 0.0
  %vm2201 = vcmp.gt.f32.partialorder %v2125, 0.0
  %vm2202 = vcmp.gt.f32.partialorder %v2130, 0.0
  %vm2203 = vcmp.gt.f32.partialorder %v2133, 0.0
  %vm2204 = vcmp.gt.f32.partialorder %v2138, 0.0
  %vm2205 = vcmp.gt.f32.partialorder %v2141, 0.0
  %vm2206 = vcmp.gt.f32.partialorder %v2146, 0.0
  %vm2207 = vcmp.gt.f32.partialorder %v2149, 0.0
  %vm2208 = vcmp.gt.f32.partialorder %v2154, 0.0
  %vm2209 = vcmp.gt.f32.partialorder %v2157, 0.0
  %vm2210 = vcmp.gt.f32.partialorder %v2162, 0.0
  %vm2211 = vcmp.gt.f32.partialorder %v2165, 0.0
  %vm2212 = vcmp.gt.f32.partialorder %v2170, 0.0
  %vm2213 = vcmp.gt.f32.partialorder %v2173, 0.0
  %vm2214 = vcmp.gt.f32.partialorder %v2178, 0.0
  %vm2215 = vcmp.gt.f32.partialorder %v2181, 0.0
  %v2216 = vmin.f32 %v2058, 0.0
  %v2217 = vmin.f32 %v2061, 0.0
  %v2218 = vmin.f32 %v2066, 0.0
  %v2219 = vmin.f32 %v2069, 0.0
  %v2220 = vmin.f32 %v2074, 0.0
  %v2221 = vmin.f32 %v2077, 0.0
  %v2222 = vmin.f32 %v2082, 0.0
  %v2223 = vmin.f32 %v2085, 0.0
  %v2224 = vmin.f32 %v2090, 0.0
  %v2225 = vmin.f32 %v2093, 0.0
  %v2226 = vmin.f32 %v2098, 0.0
  %v2227 = vmin.f32 %v2101, 0.0
  %v2228 = vmin.f32 %v2106, 0.0
  %v2229 = vmin.f32 %v2109, 0.0
  %v2230 = vmin.f32 %v2114, 0.0
  %v2231 = vmin.f32 %v2117, 0.0
  %v2232 = vmin.f32 %v2122, 0.0
  %v2233 = vmin.f32 %v2125, 0.0
  %v2234 = vmin.f32 %v2130, 0.0
  %v2235 = vmin.f32 %v2133, 0.0
  %v2236 = vmin.f32 %v2138, 0.0
  %v2237 = vmin.f32 %v2141, 0.0
  %v2238 = vmin.f32 %v2146, 0.0
  %v2239 = vmin.f32 %v2149, 0.0
  %v2240 = vmin.f32 %v2154, 0.0
  %v2241 = vmin.f32 %v2157, 0.0
  %v2242 = vmin.f32 %v2162, 0.0
  %v2243 = vmin.f32 %v2165, 0.0
  %v2244 = vmin.f32 %v2170, 0.0
  %v2245 = vmin.f32 %v2173, 0.0
  %v2246 = vmin.f32 %v2178, 0.0
  %v2247 = vmin.f32 %v2181, 0.0
  %v2248 = vmul.f32 %v2216, 1.442695
  %v2249 = vpow.pop %v2248
  %v2250 = vmul.f32 %v2217, 1.442695
  %v2251 = vpow.pop %v2250
  %v2252 = vmul.f32 %v2218, 1.442695
  %v2253 = vpow.pop %v2252
  %v2254 = vmul.f32 %v2219, 1.442695
  %v2255 = vpow.pop %v2254
  %v2256 = vmul.f32 %v2220, 1.442695
  %v2257 = vpow.pop %v2256
  %v2258 = vmul.f32 %v2221, 1.442695
  %v2259 = vpow.pop %v2258
  %v2260 = vmul.f32 %v2222, 1.442695
  %v2261 = vpow.pop %v2260
  %v2262 = vmul.f32 %v2223, 1.442695
  %v2263 = vpow.pop %v2262
  %v2264 = vmul.f32 %v2224, 1.442695
  %v2265 = vpow.pop %v2264
  %v2266 = vmul.f32 %v2225, 1.442695
  %v2267 = vpow.pop %v2266
  %v2268 = vmul.f32 %v2226, 1.442695
  %v2269 = vpow.pop %v2268
  %v2270 = vmul.f32 %v2227, 1.442695
  %v2271 = vpow.pop %v2270
  %v2272 = vmul.f32 %v2228, 1.442695
  %v2273 = vpow.pop %v2272
  %v2274 = vmul.f32 %v2229, 1.442695
  %v2275 = vpow.pop %v2274
  %v2276 = vmul.f32 %v2230, 1.442695
  %v2277 = vpow.pop %v2276
  %v2278 = vmul.f32 %v2231, 1.442695
  %v2279 = vpow.pop %v2278
  %v2280 = vmul.f32 %v2232, 1.442695
  %v2281 = vpow.pop %v2280
  %v2282 = vmul.f32 %v2233, 1.442695
  %v2283 = vpow.pop %v2282
  %v2284 = vmul.f32 %v2234, 1.442695
  %v2285 = vpow.pop %v2284
  %v2286 = vmul.f32 %v2235, 1.442695
  %v2287 = vpow.pop %v2286
  %v2288 = vmul.f32 %v2236, 1.442695
  %v2289 = vpow.pop %v2288
  %v2290 = vmul.f32 %v2237, 1.442695
  %v2291 = vpow.pop %v2290
  %v2292 = vmul.f32 %v2238, 1.442695
  %v2293 = vpow.pop %v2292
  %v2294 = vmul.f32 %v2239, 1.442695
  %v2295 = vpow.pop %v2294
  %v2296 = vmul.f32 %v2240, 1.442695
  %v2297 = vpow.pop %v2296
  %v2298 = vmul.f32 %v2241, 1.442695
  %v2299 = vpow.pop %v2298
  %v2300 = vmul.f32 %v2242, 1.442695
  %v2301 = vpow.pop %v2300
  %v2302 = vmul.f32 %v2243, 1.442695
  %v2303 = vpow.pop %v2302
  %v2304 = vmul.f32 %v2244, 1.442695
  %v2305 = vpow.pop %v2304
  %v2306 = vmul.f32 %v2245, 1.442695
  %v2307 = vpow.pop %v2306
  %v2308 = vmul.f32 %v2246, 1.442695
  %v2309 = vpow.pop %v2308
  %v2310 = vmul.f32 %v2247, 1.442695
  %v2311 = vpow.pop %v2310
  %v2312 = vsub.f32 %v2249, 1.0
  %v2313 = vsub.f32 %v2251, 1.0
  %v2314 = vsub.f32 %v2253, 1.0
  %v2315 = vsub.f32 %v2255, 1.0
  %v2316 = vsub.f32 %v2257, 1.0
  %v2317 = vsub.f32 %v2259, 1.0
  %v2318 = vsub.f32 %v2261, 1.0
  %v2319 = vsub.f32 %v2263, 1.0
  %v2320 = vsub.f32 %v2265, 1.0
  %v2321 = vsub.f32 %v2267, 1.0
  %v2322 = vsub.f32 %v2269, 1.0
  %v2323 = vsub.f32 %v2271, 1.0
  %v2324 = vsub.f32 %v2273, 1.0
  %v2325 = vsub.f32 %v2275, 1.0
  %v2326 = vsub.f32 %v2277, 1.0
  %v2327 = vsub.f32 %v2279, 1.0
  %v2328 = vsub.f32 %v2281, 1.0
  %v2329 = vsub.f32 %v2283, 1.0
  %v2330 = vsub.f32 %v2285, 1.0
  %v2331 = vsub.f32 %v2287, 1.0
  %v2332 = vsub.f32 %v2289, 1.0
  %v2333 = vsub.f32 %v2291, 1.0
  %v2334 = vsub.f32 %v2293, 1.0
  %v2335 = vsub.f32 %v2295, 1.0
  %v2336 = vsub.f32 %v2297, 1.0
  %v2337 = vsub.f32 %v2299, 1.0
  %v2338 = vsub.f32 %v2301, 1.0
  %v2339 = vsub.f32 %v2303, 1.0
  %v2340 = vsub.f32 %v2305, 1.0
  %v2341 = vsub.f32 %v2307, 1.0
  %v2342 = vsub.f32 %v2309, 1.0
  %v2343 = vsub.f32 %v2311, 1.0
  %v2344 = vmul.f32 %v2312, 1.6732632
  %v2345 = vmul.f32 %v2313, 1.6732632
  %v2346 = vmul.f32 %v2314, 1.6732632
  %v2347 = vmul.f32 %v2315, 1.6732632
  %v2348 = vmul.f32 %v2316, 1.6732632
  %v2349 = vmul.f32 %v2317, 1.6732632
  %v2350 = vmul.f32 %v2318, 1.6732632
  %v2351 = vmul.f32 %v2319, 1.6732632
  %v2352 = vmul.f32 %v2320, 1.6732632
  %v2353 = vmul.f32 %v2321, 1.6732632
  %v2354 = vmul.f32 %v2322, 1.6732632
  %v2355 = vmul.f32 %v2323, 1.6732632
  %v2356 = vmul.f32 %v2324, 1.6732632
  %v2357 = vmul.f32 %v2325, 1.6732632
  %v2358 = vmul.f32 %v2326, 1.6732632
  %v2359 = vmul.f32 %v2327, 1.6732632
  %v2360 = vmul.f32 %v2328, 1.6732632
  %v2361 = vmul.f32 %v2329, 1.6732632
  %v2362 = vmul.f32 %v2330, 1.6732632
  %v2363 = vmul.f32 %v2331, 1.6732632
  %v2364 = vmul.f32 %v2332, 1.6732632
  %v2365 = vmul.f32 %v2333, 1.6732632
  %v2366 = vmul.f32 %v2334, 1.6732632
  %v2367 = vmul.f32 %v2335, 1.6732632
  %v2368 = vmul.f32 %v2336, 1.6732632
  %v2369 = vmul.f32 %v2337, 1.6732632
  %v2370 = vmul.f32 %v2338, 1.6732632
  %v2371 = vmul.f32 %v2339, 1.6732632
  %v2372 = vmul.f32 %v2340, 1.6732632
  %v2373 = vmul.f32 %v2341, 1.6732632
  %v2374 = vmul.f32 %v2342, 1.6732632
  %v2375 = vmul.f32 %v2343, 1.6732632
  %v2376 = vsel %vm2184, %v2058, %v2344
  %v2377 = vsel %vm2185, %v2061, %v2345
  %v2378 = vsel %vm2186, %v2066, %v2346
  %v2379 = vsel %vm2187, %v2069, %v2347
  %v2380 = vsel %vm2188, %v2074, %v2348
  %v2381 = vsel %vm2189, %v2077, %v2349
  %v2382 = vsel %vm2190, %v2082, %v2350
  %v2383 = vsel %vm2191, %v2085, %v2351
  %v2384 = vsel %vm2192, %v2090, %v2352
  %v2385 = vsel %vm2193, %v2093, %v2353
  %v2386 = vsel %vm2194, %v2098, %v2354
  %v2387 = vsel %vm2195, %v2101, %v2355
  %v2388 = vsel %vm2196, %v2106, %v2356
  %v2389 = vsel %vm2197, %v2109, %v2357
  %v2390 = vsel %vm2198, %v2114, %v2358
  %v2391 = vsel %vm2199, %v2117, %v2359
  %v2392 = vsel %vm2200, %v2122, %v2360
  %v2393 = vsel %vm2201, %v2125, %v2361
  %v2394 = vsel %vm2202, %v2130, %v2362
  %v2395 = vsel %vm2203, %v2133, %v2363
  %v2396 = vsel %vm2204, %v2138, %v2364
  %v2397 = vsel %vm2205, %v2141, %v2365
  %v2398 = vsel %vm2206, %v2146, %v2366
  %v2399 = vsel %vm2207, %v2149, %v2367
  %v2400 = vsel %vm2208, %v2154, %v2368
  %v2401 = vsel %vm2209, %v2157, %v2369
  %v2402 = vsel %vm2210, %v2162, %v2370
  %v2403 = vsel %vm2211, %v2165, %v2371
  %v2404 = vsel %vm2212, %v2170, %v2372
  %v2405 = vsel %vm2213, %v2173, %v2373
  %v2406 = vsel %vm2214, %v2178, %v2374
  %v2407 = vsel %vm2215, %v2181, %v2375
  %v2408 = vmul.f32 %v2376, 1.050701
  %v2409 = vmul.f32 %v2377, 1.050701
  %v2410 = vmul.f32 %v2378, 1.050701
  %v2411 = vmul.f32 %v2379, 1.050701
  %v2412 = vmul.f32 %v2380, 1.050701
  %v2413 = vmul.f32 %v2381, 1.050701
  %v2414 = vmul.f32 %v2382, 1.050701
  %v2415 = vmul.f32 %v2383, 1.050701
  %v2416 = vmul.f32 %v2384, 1.050701
  %v2417 = vmul.f32 %v2385, 1.050701
  %v2418 = vmul.f32 %v2386, 1.050701
  %v2419 = vmul.f32 %v2387, 1.050701
  %v2420 = vmul.f32 %v2388, 1.050701
  %v2421 = vmul.f32 %v2389, 1.050701
  %v2422 = vmul.f32 %v2390, 1.050701
  %v2423 = vmul.f32 %v2391, 1.050701
  %v2424 = vmul.f32 %v2392, 1.050701
  %v2425 = vmul.f32 %v2393, 1.050701
  %v2426 = vmul.f32 %v2394, 1.050701
  %v2427 = vmul.f32 %v2395, 1.050701
  %v2428 = vmul.f32 %v2396, 1.050701
  %v2429 = vmul.f32 %v2397, 1.050701
  %v2430 = vmul.f32 %v2398, 1.050701
  %v2431 = vmul.f32 %v2399, 1.050701
  %v2432 = vmul.f32 %v2400, 1.050701
  %v2433 = vmul.f32 %v2401, 1.050701
  %v2434 = vmul.f32 %v2402, 1.050701
  %v2435 = vmul.f32 %v2403, 1.050701
  %v2436 = vmul.f32 %v2404, 1.050701
  %v2437 = vmul.f32 %v2405, 1.050701
  %v2438 = vmul.f32 %v2406, 1.050701
  %v2439 = vmul.f32 %v2407, 1.050701
  %v2440 = vld [vmem:[%s7] sm:$0x1]
  %v2442 = vlaneseq
  %v2443 = vshrl.u32 %v2442, 7
  %v2444 = vsub.s32 0, %v2443
  %v2445 = vrot.slane %v2440, %v2444
  %v2447 = vadd.f32 %v2408, %v2445
  %v2448 = vadd.f32 %v2409, %v2445
  %v2449 = vadd.f32 %v2410, %v2445
  %v2450 = vadd.f32 %v2411, %v2445
  %v2451 = vadd.f32 %v2412, %v2445
  %v2452 = vadd.f32 %v2413, %v2445
  %v2453 = vadd.f32 %v2414, %v2445
  %v2454 = vadd.f32 %v2415, %v2445
  %v2455 = vadd.f32 %v2416, %v2445
  %v2456 = vadd.f32 %v2417, %v2445
  %v2457 = vadd.f32 %v2418, %v2445
  %v2458 = vadd.f32 %v2419, %v2445
  %v2459 = vadd.f32 %v2420, %v2445
  %v2460 = vadd.f32 %v2421, %v2445
  %v2461 = vadd.f32 %v2422, %v2445
  %v2462 = vadd.f32 %v2423, %v2445
  %v2463 = vadd.f32 %v2424, %v2445
  %v2464 = vadd.f32 %v2425, %v2445
  %v2465 = vadd.f32 %v2426, %v2445
  %v2466 = vadd.f32 %v2427, %v2445
  %v2467 = vadd.f32 %v2428, %v2445
  %v2468 = vadd.f32 %v2429, %v2445
  %v2469 = vadd.f32 %v2430, %v2445
  %v2470 = vadd.f32 %v2431, %v2445
  %v2471 = vadd.f32 %v2432, %v2445
  %v2472 = vadd.f32 %v2433, %v2445
  %v2473 = vadd.f32 %v2434, %v2445
  %v2474 = vadd.f32 %v2435, %v2445
  %v2475 = vadd.f32 %v2436, %v2445
  %v2476 = vadd.f32 %v2437, %v2445
  %v2477 = vadd.f32 %v2438, %v2445
  %v2478 = vadd.f32 %v2439, %v2445
  %v2479 = vpack.c.bf16 %v2448, %v2447
  %v2480 = vpack.c.bf16 %v2450, %v2449
  %v2481 = vpack.c.bf16 %v2452, %v2451
  %v2482 = vpack.c.bf16 %v2454, %v2453
  %v2483 = vpack.c.bf16 %v2456, %v2455
  %v2484 = vpack.c.bf16 %v2458, %v2457
  %v2485 = vpack.c.bf16 %v2460, %v2459
  %v2486 = vpack.c.bf16 %v2462, %v2461
  %v2487 = vpack.c.bf16 %v2464, %v2463
  %v2488 = vpack.c.bf16 %v2466, %v2465
  %v2489 = vpack.c.bf16 %v2468, %v2467
  %v2490 = vpack.c.bf16 %v2470, %v2469
  %v2491 = vpack.c.bf16 %v2472, %v2471
  %v2492 = vpack.c.bf16 %v2474, %v2473
  %v2493 = vpack.c.bf16 %v2476, %v2475
  %v2494 = vpack.c.bf16 %v2478, %v2477
  %v2495 = vld [vmem:[%s8] sm:$0xf]
  %v2496 = vld [vmem:[%s8 + $0x4] sm:$0xf]
  %v2497 = vld [vmem:[%s8 + $0x8] sm:$0xf]
  %v2498 = vld [vmem:[%s8 + $0xc] sm:$0xf]
  %v2499 = vld [vmem:[%s8 + $0x10] sm:$0xf]
  %v2500 = vld [vmem:[%s8 + $0x14] sm:$0xf]
  %v2501 = vld [vmem:[%s8 + $0x18] sm:$0xf]
  %v2502 = vld [vmem:[%s8 + $0x1c] sm:$0xf]
  %v2503 = vld [vmem:[%s8 + $0x20] sm:$0xf]
  %v2504 = vld [vmem:[%s8 + $0x24] sm:$0xf]
  %v2505 = vld [vmem:[%s8 + $0x28] sm:$0xf]
  %v2506 = vld [vmem:[%s8 + $0x2c] sm:$0xf]
  %v2507 = vld [vmem:[%s8 + $0x30] sm:$0xf]
  %v2508 = vld [vmem:[%s8 + $0x34] sm:$0xf]
  %v2509 = vld [vmem:[%s8 + $0x38] sm:$0xf]
  %v2510 = vld [vmem:[%s8 + $0x3c] sm:$0xf]
  %v2511 = vld [vmem:[%s9] sm:$0x1]
  %v2513 = vlaneseq
  %v2514 = vshrl.u32 %v2513, 7
  %v2515 = vsub.s32 0, %v2514
  %v2516 = vrot.slane %v2511, %v2515
  %v2534 = vunpack.c.l.b16 %v2495
  %v2535 = vunpack.c.l.b16 %v2496
  %v2536 = vunpack.c.l.b16 %v2497
  %v2537 = vunpack.c.l.b16 %v2498
  %v2538 = vunpack.c.l.b16 %v2499
  %v2539 = vunpack.c.l.b16 %v2500
  %v2540 = vunpack.c.l.b16 %v2501
  %v2541 = vunpack.c.l.b16 %v2502
  %v2542 = vunpack.c.l.b16 %v2503
  %v2543 = vunpack.c.l.b16 %v2504
  %v2544 = vunpack.c.l.b16 %v2505
  %v2545 = vunpack.c.l.b16 %v2506
  %v2546 = vunpack.c.l.b16 %v2507
  %v2547 = vunpack.c.l.b16 %v2508
  %v2548 = vunpack.c.l.b16 %v2509
  %v2549 = vunpack.c.l.b16 %v2510
  %v2550 = vpack.c.b16 %v2535, %v2534
  %v2551 = vpack.c.b16 %v2537, %v2536
  %v2552 = vpack.c.b16 %v2539, %v2538
  %v2553 = vpack.c.b16 %v2541, %v2540
  %v2554 = vpack.c.b16 %v2543, %v2542
  %v2555 = vpack.c.b16 %v2545, %v2544
  %v2556 = vpack.c.b16 %v2547, %v2546
  %v2557 = vpack.c.b16 %v2549, %v2548
  %2566 = vmatprep.subr.bf16.mxu0 0
  %2567 = vmatpush1.bf16.msra.mxu0 %v2550
  %2568 = vmatprep.subr.bf16.mxu0 0
  %2569 = vmatpush1.bf16.msra.mxu0 %v2551
  %2570 = vmatprep.subr.bf16.mxu0 0
  %2571 = vmatpush1.bf16.msra.mxu0 %v2552
  %2572 = vmatprep.subr.bf16.mxu0 0
  %2573 = vmatpush1.bf16.msra.mxu0 %v2553
  %2574 = vmatprep.subr.bf16.mxu0 0
  %2575 = vmatpush1.bf16.msra.mxu0 %v2554
  %2576 = vmatprep.subr.bf16.mxu0 0
  %2577 = vmatpush1.bf16.msra.mxu0 %v2555
  %2578 = vmatprep.subr.bf16.mxu0 0
  %2579 = vmatpush1.bf16.msra.mxu0 %v2556
  %2580 = vmatprep.subr.bf16.mxu0 0
  %2581 = vmatpush1.bf16.msra.mxu0 %v2557
  %2582 = vmatprep.subr.bf16.mxu0 0
  %2583 = vmatpush1.bf16.msra.mxu0 0
  %2584 = vmatprep.subr.bf16.mxu0 0
  %2585 = vmatpush1.bf16.msra.mxu0 0
  %2586 = vmatprep.subr.bf16.mxu0 0
  %2587 = vmatpush1.bf16.msra.mxu0 0
  %2588 = vmatprep.subr.bf16.mxu0 0
  %2589 = vmatpush1.bf16.msra.mxu0 0
  %2590 = vmatprep.subr.bf16.mxu0 0
  %2591 = vmatpush1.bf16.msra.mxu0 0
  %2592 = vmatprep.subr.bf16.mxu0 0
  %2593 = vmatpush1.bf16.msra.mxu0 0
  %2594 = vmatprep.subr.bf16.mxu0 0
  %2595 = vmatpush1.bf16.msra.mxu0 0
  %2596 = vmatprep.subr.bf16.mxu0 0
  %2597 = vmatpush1.bf16.msra.mxu0 0
  %2598 = vmatprep.mubr.bf16.mxu0 0
  %2599 = vmatmul.mubr.bf16.gmra.mrb[0].mxu0 %v2479
  %v2600 = vpop.f32.mrb[0].mxu0
  %v2601 = vadd.f32 %v2516, %v2600
  %v2602 = vpop.f32.mrb[0].mxu0
  %v2603 = vpop.f32.mrb[0].mxu0
  %v2604 = vadd.f32 %v2516, %v2603
  %v2605 = vpop.f32.mrb[0].mxu0
  %2606 = vmatprep.mubr.bf16.mxu0 0
  %2607 = vmatmul.mubr.bf16.gmra.mrb[0].mxu0 %v2480
  %v2608 = vpop.f32.mrb[0].mxu0
  %v2609 = vadd.f32 %v2516, %v2608
  %v2610 = vpop.f32.mrb[0].mxu0
  %v2611 = vpop.f32.mrb[0].mxu0
  %v2612 = vadd.f32 %v2516, %v2611
  %v2613 = vpop.f32.mrb[0].mxu0
  %2614 = vmatprep.mubr.bf16.mxu0 0
  %2615 = vmatmul.mubr.bf16.gmra.mrb[0].mxu0 %v2481
  %v2616 = vpop.f32.mrb[0].mxu0
  %v2617 = vadd.f32 %v2516, %v2616
  %v2618 = vpop.f32.mrb[0].mxu0
  %v2619 = vpop.f32.mrb[0].mxu0
  %v2620 = vadd.f32 %v2516, %v2619
  %v2621 = vpop.f32.mrb[0].mxu0
  %2622 = vmatprep.mubr.bf16.mxu0 0
  %2623 = vmatmul.mubr.bf16.gmra.mrb[0].mxu0 %v2482
  %v2624 = vpop.f32.mrb[0].mxu0
  %v2625 = vadd.f32 %v2516, %v2624
  %v2626 = vpop.f32.mrb[0].mxu0
  %v2627 = vpop.f32.mrb[0].mxu0
  %v2628 = vadd.f32 %v2516, %v2627
  %v2629 = vpop.f32.mrb[0].mxu0
  %2630 = vmatprep.mubr.bf16.mxu0 0
  %2631 = vmatmul.mubr.bf16.gmra.mrb[0].mxu0 %v2483
  %v2632 = vpop.f32.mrb[0].mxu0
  %v2633 = vadd.f32 %v2516, %v2632
  %v2634 = vpop.f32.mrb[0].mxu0
  %v2635 = vpop.f32.mrb[0].mxu0
  %v2636 = vadd.f32 %v2516, %v2635
  %v2637 = vpop.f32.mrb[0].mxu0
  %2638 = vmatprep.mubr.bf16.mxu0 0
  %2639 = vmatmul.mubr.bf16.gmra.mrb[0].mxu0 %v2484
  %v2640 = vpop.f32.mrb[0].mxu0
  %v2641 = vadd.f32 %v2516, %v2640
  %v2642 = vpop.f32.mrb[0].mxu0
  %v2643 = vpop.f32.mrb[0].mxu0
  %v2644 = vadd.f32 %v2516, %v2643
  %v2645 = vpop.f32.mrb[0].mxu0
  %2646 = vmatprep.mubr.bf16.mxu0 0
  %2647 = vmatmul.mubr.bf16.gmra.mrb[0].mxu0 %v2485
  %v2648 = vpop.f32.mrb[0].mxu0
  %v2649 = vadd.f32 %v2516, %v2648
  %v2650 = vpop.f32.mrb[0].mxu0
  %v2651 = vpop.f32.mrb[0].mxu0
  %v2652 = vadd.f32 %v2516, %v2651
  %v2653 = vpop.f32.mrb[0].mxu0
  %2654 = vmatprep.mubr.bf16.mxu0 0
  %2655 = vmatmul.mubr.bf16.gmra.mrb[0].mxu0 %v2486
  %v2656 = vpop.f32.mrb[0].mxu0
  %v2657 = vadd.f32 %v2516, %v2656
  %v2658 = vpop.f32.mrb[0].mxu0
  %v2659 = vpop.f32.mrb[0].mxu0
  %v2660 = vadd.f32 %v2516, %v2659
  %v2661 = vpop.f32.mrb[0].mxu0
  %2662 = vmatprep.mubr.bf16.mxu0 0
  %2663 = vmatmul.mubr.bf16.gmra.mrb[0].mxu0 %v2487
  %v2664 = vpop.f32.mrb[0].mxu0
  %v2665 = vadd.f32 %v2516, %v2664
  %v2666 = vpop.f32.mrb[0].mxu0
  %v2667 = vpop.f32.mrb[0].mxu0
  %v2668 = vadd.f32 %v2516, %v2667
  %v2669 = vpop.f32.mrb[0].mxu0
  %2670 = vmatprep.mubr.bf16.mxu0 0
  %2671 = vmatmul.mubr.bf16.gmra.mrb[0].mxu0 %v2488
  %v2672 = vpop.f32.mrb[0].mxu0
  %v2673 = vadd.f32 %v2516, %v2672
  %v2674 = vpop.f32.mrb[0].mxu0
  %v2675 = vpop.f32.mrb[0].mxu0
  %v2676 = vadd.f32 %v2516, %v2675
  %v2677 = vpop.f32.mrb[0].mxu0
  %2678 = vmatprep.mubr.bf16.mxu0 0
  %2679 = vmatmul.mubr.bf16.gmra.mrb[0].mxu0 %v2489
  %v2680 = vpop.f32.mrb[0].mxu0
  %v2681 = vadd.f32 %v2516, %v2680
  %v2682 = vpop.f32.mrb[0].mxu0
  %v2683 = vpop.f32.mrb[0].mxu0
  %v2684 = vadd.f32 %v2516, %v2683
  %v2685 = vpop.f32.mrb[0].mxu0
  %2686 = vmatprep.mubr.bf16.mxu0 0
  %2687 = vmatmul.mubr.bf16.gmra.mrb[0].mxu0 %v2490
  %v2688 = vpop.f32.mrb[0].mxu0
  %v2689 = vadd.f32 %v2516, %v2688
  %v2690 = vpop.f32.mrb[0].mxu0
  %v2691 = vpop.f32.mrb[0].mxu0
  %v2692 = vadd.f32 %v2516, %v2691
  %v2693 = vpop.f32.mrb[0].mxu0
  %2694 = vmatprep.mubr.bf16.mxu0 0
  %2695 = vmatmul.mubr.bf16.gmra.mrb[0].mxu0 %v2491
  %v2696 = vpop.f32.mrb[0].mxu0
  %v2697 = vadd.f32 %v2516, %v2696
  %v2698 = vpop.f32.mrb[0].mxu0
  %v2699 = vpop.f32.mrb[0].mxu0
  %v2700 = vadd.f32 %v2516, %v2699
  %v2701 = vpop.f32.mrb[0].mxu0
  %2702 = vmatprep.mubr.bf16.mxu0 0
  %2703 = vmatmul.mubr.bf16.gmra.mrb[0].mxu0 %v2492
  %v2704 = vpop.f32.mrb[0].mxu0
  %v2705 = vadd.f32 %v2516, %v2704
  %v2706 = vpop.f32.mrb[0].mxu0
  %v2707 = vpop.f32.mrb[0].mxu0
  %v2708 = vadd.f32 %v2516, %v2707
  %v2709 = vpop.f32.mrb[0].mxu0
  %2710 = vmatprep.mubr.bf16.mxu0 0
  %2711 = vmatmul.mubr.bf16.gmra.mrb[0].mxu0 %v2493
  %v2712 = vpop.f32.mrb[0].mxu0
  %v2713 = vadd.f32 %v2516, %v2712
  %v2714 = vpop.f32.mrb[0].mxu0
  %v2715 = vpop.f32.mrb[0].mxu0
  %v2716 = vadd.f32 %v2516, %v2715
  %v2717 = vpop.f32.mrb[0].mxu0
  %2718 = vmatprep.mubr.bf16.mxu0 0
  %2719 = vmatmul.mubr.bf16.gmra.mrb[0].mxu0 %v2494
  %v2720 = vpop.f32.mrb[0].mxu0
  %v2721 = vadd.f32 %v2516, %v2720
  %v2722 = vpop.f32.mrb[0].mxu0
  %v2723 = vpop.f32.mrb[0].mxu0
  %v2724 = vadd.f32 %v2516, %v2723
  %v2725 = vpop.f32.mrb[0].mxu0
  %2726 = vdwg.mxu0
  %2727 = vst [vmem:[%s10] sm:$0xff] %v2601
  %2728 = vst [vmem:[%s10 + $0x8] sm:$0xff] %v2604
  %2729 = vst [vmem:[%s10 + $0x10] sm:$0xff] %v2609
  %2730 = vst [vmem:[%s10 + $0x18] sm:$0xff] %v2612
  %2731 = vst [vmem:[%s10 + $0x20] sm:$0xff] %v2617
  %2732 = vst [vmem:[%s10 + $0x28] sm:$0xff] %v2620
  %2733 = vst [vmem:[%s10 + $0x30] sm:$0xff] %v2625
  %2734 = vst [vmem:[%s10 + $0x38] sm:$0xff] %v2628
  %2735 = vst [vmem:[%s10 + $0x40] sm:$0xff] %v2633
  %2736 = vst [vmem:[%s10 + $0x48] sm:$0xff] %v2636
  %2737 = vst [vmem:[%s10 + $0x50] sm:$0xff] %v2641
  %2738 = vst [vmem:[%s10 + $0x58] sm:$0xff] %v2644
  %2739 = vst [vmem:[%s10 + $0x60] sm:$0xff] %v2649
  %2740 = vst [vmem:[%s10 + $0x68] sm:$0xff] %v2652
  %2741 = vst [vmem:[%s10 + $0x70] sm:$0xff] %v2657
  %2742 = vst [vmem:[%s10 + $0x78] sm:$0xff] %v2660
  %2743 = vst [vmem:[%s10 + $0x80] sm:$0xff] %v2665
  %2744 = vst [vmem:[%s10 + $0x88] sm:$0xff] %v2668
  %2745 = vst [vmem:[%s10 + $0x90] sm:$0xff] %v2673
  %2746 = vst [vmem:[%s10 + $0x98] sm:$0xff] %v2676
  %2747 = vst [vmem:[%s10 + $0xa0] sm:$0xff] %v2681
  %2748 = vst [vmem:[%s10 + $0xa8] sm:$0xff] %v2684
  %2749 = vst [vmem:[%s10 + $0xb0] sm:$0xff] %v2689
  %2750 = vst [vmem:[%s10 + $0xb8] sm:$0xff] %v2692
  %2751 = vst [vmem:[%s10 + $0xc0] sm:$0xff] %v2697
  %2752 = vst [vmem:[%s10 + $0xc8] sm:$0xff] %v2700
  %2753 = vst [vmem:[%s10 + $0xd0] sm:$0xff] %v2705
  %2754 = vst [vmem:[%s10 + $0xd8] sm:$0xff] %v2708
  %2755 = vst [vmem:[%s10 + $0xe0] sm:$0xff] %v2713
  %2756 = vst [vmem:[%s10 + $0xe8] sm:$0xff] %v2716
  %2757 = vst [vmem:[%s10 + $0xf0] sm:$0xff] %v2721
  %2758 = vst [vmem:[%s10 + $0xf8] sm:$0xff] %v2724
  // Predicated region
  $region42: #{gcn_forward.1} parent=0 // pred_check
    _
  $region43: #{gcn_forward.1} parent=0 // pred_check_branch
    %2760 = sbr.rel (0) target = $region45
  $region44: #{gcn_forward.1} parent=0 // pred_region
    _
  $region45: #{gcn_forward.1} parent=0 // pred_fallthru
    _
  // Predicated region
  $region46: #{gcn_forward.1} parent=0 // pred_check
    _
  $region47: #{gcn_forward.1} parent=0 // pred_check_branch
    %2762 = sbr.rel (0) target = $region49
  $region48: #{gcn_forward.1} parent=0 // pred_region
    _
  $region49: #{gcn_forward.1} parent=0 // pred_fallthru
    _

</llo_original>
